<compile_context>
chip_gen: v6e
topology: v6e:2x2x1
jax: 0.10.0
libtpu: 0.0.40
codegen_flags: <defaults>
</compile_context>

<pallas_src>
import math
import functools

import jax
import jax.numpy as jnp
from jax import lax
from jax.experimental import pallas as pl
from jax.experimental.pallas import tpu as pltpu


# ---------------------------------------------------------------------------
# in-kernel helpers
# ---------------------------------------------------------------------------
def _layer_norm(x, gamma, beta, eps):
    mean = jnp.mean(x, axis=-1, keepdims=True)
    var = jnp.mean((x - mean) ** 2, axis=-1, keepdims=True)
    return (x - mean) * lax.rsqrt(var + eps) * gamma + beta


# ---------------------------------------------------------------------------
# Pallas kernel: BertAttention for one (batch, query-tile) block
# ---------------------------------------------------------------------------
def bert_attention_kernel(xq_ref, xkv_ref, mask_ref,
                          wq_ref, bq_ref, wk_ref, bk_ref, wv_ref, bv_ref,
                          wo_ref, bo_ref, g_ref, b_ref,
                          out_ref, ctx_ref,
                          *, num_heads, head_dim, eps):
    xq = xq_ref[0]                                # (tS, H) f32 — query rows / residual
    xkv = xkv_ref[0]                              # (S,  H) f32 — full sequence for K/V
    mask = mask_ref[0]                            # (1,  S) f32 additive mask

    xq_bf = xq.astype(jnp.bfloat16)
    xkv_bf = xkv.astype(jnp.bfloat16)

    # --- QKV projections: bf16 operands on MXU, f32 accumulation.
    #     1/sqrt(head_dim) is pre-folded into wq/bq by the wrapper.
    q = (jnp.dot(xq_bf, wq_ref[...],
                 preferred_element_type=jnp.float32) + bq_ref[0]
         ).astype(jnp.bfloat16)                   # (tS, H)
    k = (jnp.dot(xkv_bf, wk_ref[...],
                 preferred_element_type=jnp.float32) + bk_ref[0]
         ).astype(jnp.bfloat16)                   # (S, H)
    v = (jnp.dot(xkv_bf, wv_ref[...],
                 preferred_element_type=jnp.float32) + bv_ref[0]
         ).astype(jnp.bfloat16)                   # (S, H)

    # --- per-head scaled-dot-product attention; each head's context is
    #     written directly into its lane slice of the (tS, H) scratch.
    for h in range(num_heads):                    # static unroll over heads
        lo = h * head_dim
        qh = q[:, lo:lo + head_dim]               # (tS, dh) bf16
        kh = k[:, lo:lo + head_dim]               # (S,  dh) bf16
        vh = v[:, lo:lo + head_dim]               # (S,  dh) bf16

        # q @ k^T as an NT dot_general (no materialized transpose)
        scores = lax.dot_general(
            qh, kh, dimension_numbers=(((1,), (1,)), ((), ())),
            preferred_element_type=jnp.float32)   # (tS, S) f32
        scores = scores + mask                    # (1, S) broadcasts over rows

        # softmax in f32; division via EUP approximate reciprocal
        m = jnp.max(scores, axis=-1, keepdims=True)
        p = jnp.exp(scores - m)
        probs = p * pl.reciprocal(jnp.sum(p, axis=-1, keepdims=True),
                                  approx=True)

        ctx_h = jnp.dot(probs.astype(jnp.bfloat16), vh,
                        preferred_element_type=jnp.float32)   # (tS, dh)
        ctx_ref[:, lo:lo + head_dim] = ctx_h.astype(jnp.bfloat16)

    # dropout on attention_probs / hidden_states: identity (eval mode)
    # TODO(synk): training-mode dropout would need pltpu.prng_* + masks.

    # --- attention output: single full-width dense + residual + LayerNorm
    attn = jnp.dot(ctx_ref[...], wo_ref[...],
                   preferred_element_type=jnp.float32) + bo_ref[0]
    out_ref[0] = _layer_norm(attn + xq, g_ref[0], b_ref[0], eps)


# ---------------------------------------------------------------------------
# wrapper
# ---------------------------------------------------------------------------
def bert_attention_pallas(hidden_states, attention_mask, p, num_heads, eps):
    B, S, H = hidden_states.shape
    dh = H // num_heads

    # query-side sequence tiling (megacore sharding + per-step VMEM shrink)
    tS = S
    for cand in (512, 256, 128):
        if S > cand and S % cand == 0:
            tS = cand
            break
    n_qt = S // tS

    # additive mask, kept at (B, 1, S): broadcast over query rows in-kernel
    m = (attention_mask > 0).astype(jnp.float32)
    mask_add = (-10000.0 * (1.0 - m))[:, None, :]            # (B, 1, S)

    # fold 1/sqrt(head_dim) into the query projection (free at trace time);
    # matmul weights go to bf16, biases / LayerNorm params stay f32.
    scale = 1.0 / math.sqrt(dh)
    wq = (p["wq"] * scale).astype(jnp.bfloat16)
    bq = (p["bq"] * scale).astype(jnp.float32)
    wk = p["wk"].astype(jnp.bfloat16)
    wv = p["wv"].astype(jnp.bfloat16)
    wo = p["wo"].astype(jnp.bfloat16)

    kernel = functools.partial(bert_attention_kernel,
                               num_heads=num_heads, head_dim=dh, eps=eps)

    def rep2(shape):                               # replicated 2-D param
        return pl.BlockSpec(shape, lambda b, s: (0, 0))

    in_specs = [
        pl.BlockSpec((1, tS, H), lambda b, s: (b, s, 0)),    # x (query rows)
        pl.BlockSpec((1, S, H), lambda b, s: (b, 0, 0)),     # x (full seq, K/V)
        pl.BlockSpec((1, 1, S), lambda b, s: (b, 0, 0)),     # additive mask
        rep2((H, H)), rep2((1, H)),                          # query   W, b
        rep2((H, H)), rep2((1, H)),                          # key     W, b
        rep2((H, H)), rep2((1, H)),                          # value   W, b
        rep2((H, H)), rep2((1, H)),                          # output  W, b
        rep2((1, H)), rep2((1, H)),                          # LayerNorm gamma, beta
    ]
    out_spec = pl.BlockSpec((1, tS, H), lambda b, s: (b, s, 0))

    # explicit VMEM budget (bf16 weights + f32 activations, 2x for
    # double-buffering, plus headroom)
    w_bytes = 4 * H * H * 2 + 4 * H * 4 + 2 * H * 4
    act_bytes = (tS * H + S * H + S) * 4 + tS * H * 4
    scratch_bytes = tS * H * 2
    vmem_limit = 2 * (w_bytes + act_bytes) + scratch_bytes + (8 << 20)
    vmem_limit = int(min(max(vmem_limit, 32 << 20), 100 << 20))

    # advisory cost estimate for the XLA scheduler
    flops = 2 * B * (4 * S * H * H + 2 * S * S * H)
    cost = pl.CostEstimate(
        flops=flops,
        transcendentals=B * num_heads * S * S,
        bytes_accessed=w_bytes + 2 * B * S * H * 4 + B * S * 4)

    return pl.pallas_call(
        kernel,
        out_shape=jax.ShapeDtypeStruct((B, S, H), jnp.float32),
        grid=(B, n_qt),
        in_specs=in_specs,
        out_specs=out_spec,
        scratch_shapes=[pltpu.VMEM((tS, H), jnp.bfloat16)],
        compiler_params=pltpu.CompilerParams(
            dimension_semantics=("parallel", "parallel"),
            vmem_limit_bytes=vmem_limit),
        cost_estimate=cost,
    )(hidden_states, hidden_states, mask_add,
      wq, bq, wk, p["bk"], wv, p["bv"], wo, p["bo"], p["g"], p["b"])


# ---------------------------------------------------------------------------
# pure-JAX f32 reference (sanity check)
# ---------------------------------------------------------------------------
def bert_attention_ref(x, attention_mask, p, num_heads, eps):
    B, S, H = x.shape
    dh = H // num_heads
    m = (attention_mask > 0).astype(jnp.float32)
    mask_add = (-10000.0 * (1.0 - m))[:, None, None, :]      # (B,1,1,S)

    q = x @ p["wq"] + p["bq"]
    k = x @ p["wk"] + p["bk"]
    v = x @ p["wv"] + p["bv"]

    def split(t):
        return t.reshape(B, S, num_heads, dh).transpose(0, 2, 1, 3)

    qh, kh, vh = split(q), split(k), split(v)
    scores = jnp.einsum("bhqd,bhkd->bhqk", qh, kh) / math.sqrt(dh) + mask_add
    probs = jax.nn.softmax(scores, axis=-1)
    ctx = jnp.einsum("bhqk,bhkd->bhqd", probs, vh)
    ctx = ctx.transpose(0, 2, 1, 3).reshape(B, S, H)

    attn = ctx @ p["wo"] + p["bo"]
    return _layer_norm(attn + x, p["g"], p["b"], eps)


# ---------------------------------------------------------------------------
# deterministic synthetic parameters
# ---------------------------------------------------------------------------
def init_params(key, H):
    ks = jax.random.split(key, 10)
    lin = lambda k, fi, fo: 0.02 * jax.random.normal(k, (fi, fo), jnp.float32)
    bias = lambda k, fo: 0.01 * jax.random.normal(k, (1, fo), jnp.float32)
    return dict(
        wq=lin(ks[0], H, H), bq=bias(ks[1], H),
        wk=lin(ks[2], H, H), bk=bias(ks[3], H),
        wv=lin(ks[4], H, H), bv=bias(ks[5], H),
        wo=lin(ks[6], H, H), bo=bias(ks[7], H),
        g=1.0 + 0.1 * jax.random.normal(ks[8], (1, H), jnp.float32),
        b=0.1 * jax.random.normal(ks[9], (1, H), jnp.float32),
    )


# ---------------------------------------------------------------------------
if __name__ == "__main__":
    B, S, H, NUM_HEADS = 2, 8, 32, 4
    EPS = 1e-12

    key = jax.random.PRNGKey(0)
    kx, kp = jax.random.split(key, 2)
    hidden_states = jax.random.normal(kx, (B, S, H), jnp.float32)
    attn_mask = jnp.array([[1, 1, 1, 1, 1, 1, 1, 1],
                           [1, 1, 1, 1, 1, 1, 0, 0]], jnp.int32)
    params = init_params(kp, H)

    out = bert_attention_pallas(hidden_states, attn_mask, params,
                                NUM_HEADS, EPS)
    out = jax.block_until_ready(out)

    assert out.shape == (B, S, H)
    assert bool(jnp.all(jnp.isfinite(out)))

    # loose tolerance: bf16 MXU operands + approx reciprocal vs f32 reference
    ref = bert_attention_ref(hidden_states, attn_mask, params, NUM_HEADS, EPS)
    if not jnp.allclose(out, ref, atol=5e-2, rtol=5e-2):
        raise SystemExit("mismatch: max abs err = %g"
                         % float(jnp.max(jnp.abs(out - ref))))

    print("KERNEL_OK")
</pallas_src>

<mosaic_0001>
module attributes {stable_mosaic.version = 11 : i64} {
  func.func @bert_attention_kernel(%arg0: i32, %arg1: i32, %arg2: memref<1x8x32xf32, #tpu.memory_space<vmem>>, %arg3: memref<1x8x32xf32, #tpu.memory_space<vmem>>, %arg4: memref<1x1x8xf32, #tpu.memory_space<vmem>>, %arg5: memref<32x32xbf16, #tpu.memory_space<vmem>>, %arg6: memref<1x32xf32, #tpu.memory_space<vmem>>, %arg7: memref<32x32xbf16, #tpu.memory_space<vmem>>, %arg8: memref<1x32xf32, #tpu.memory_space<vmem>>, %arg9: memref<32x32xbf16, #tpu.memory_space<vmem>>, %arg10: memref<1x32xf32, #tpu.memory_space<vmem>>, %arg11: memref<32x32xbf16, #tpu.memory_space<vmem>>, %arg12: memref<1x32xf32, #tpu.memory_space<vmem>>, %arg13: memref<1x32xf32, #tpu.memory_space<vmem>>, %arg14: memref<1x32xf32, #tpu.memory_space<vmem>>, %arg15: memref<1x8x32xf32, #tpu.memory_space<vmem>>, %arg16: memref<8x32xbf16, #tpu.memory_space<vmem>>) attributes {dimension_semantics = [#tpu.dimension_semantics<parallel>, #tpu.dimension_semantics<parallel>], iteration_bounds = array<i64: 2, 1>, scalar_prefetch = 0 : i64, scratch_operands = 1 : i64, tpu.core_type = #tpu.core_type<tc>, window_params = [{transform_indices = @transform_0, window_bounds = array<i64: 1, 8, 32>}, {transform_indices = @transform_1, window_bounds = array<i64: 1, 8, 32>}, {transform_indices = @transform_2, window_bounds = array<i64: 1, 1, 8>}, {pipeline_mode = #tpu.pipeline_mode<synchronous>, transform_indices = @transform_3, window_bounds = array<i64: 32, 32>}, {pipeline_mode = #tpu.pipeline_mode<synchronous>, transform_indices = @transform_4, window_bounds = array<i64: 1, 32>}, {pipeline_mode = #tpu.pipeline_mode<synchronous>, transform_indices = @transform_5, window_bounds = array<i64: 32, 32>}, {pipeline_mode = #tpu.pipeline_mode<synchronous>, transform_indices = @transform_6, window_bounds = array<i64: 1, 32>}, {pipeline_mode = #tpu.pipeline_mode<synchronous>, transform_indices = @transform_7, window_bounds = array<i64: 32, 32>}, {pipeline_mode = #tpu.pipeline_mode<synchronous>, transform_indices = @transform_8, window_bounds = array<i64: 1, 32>}, {pipeline_mode = #tpu.pipeline_mode<synchronous>, transform_indices = @transform_9, window_bounds = array<i64: 32, 32>}, {pipeline_mode = #tpu.pipeline_mode<synchronous>, transform_indices = @transform_10, window_bounds = array<i64: 1, 32>}, {pipeline_mode = #tpu.pipeline_mode<synchronous>, transform_indices = @transform_11, window_bounds = array<i64: 1, 32>}, {pipeline_mode = #tpu.pipeline_mode<synchronous>, transform_indices = @transform_12, window_bounds = array<i64: 1, 32>}, {transform_indices = @transform_13, window_bounds = array<i64: 1, 8, 32>}]} {
    %c0 = arith.constant 0 : index
    %c0_0 = arith.constant 0 : index
    %c0_1 = arith.constant 0 : index
    %0 = vector.load %arg2[%c0, %c0_0, %c0_1] : memref<1x8x32xf32, #tpu.memory_space<vmem>>, vector<1x8x32xf32>
    %1 = vector.shape_cast %0 : vector<1x8x32xf32> to vector<8x32xf32>
    %c0_2 = arith.constant 0 : index
    %c0_3 = arith.constant 0 : index
    %c0_4 = arith.constant 0 : index
    %2 = vector.load %arg3[%c0_2, %c0_3, %c0_4] : memref<1x8x32xf32, #tpu.memory_space<vmem>>, vector<1x8x32xf32>
    %3 = vector.shape_cast %2 : vector<1x8x32xf32> to vector<8x32xf32>
    %c0_5 = arith.constant 0 : index
    %c0_6 = arith.constant 0 : index
    %c0_7 = arith.constant 0 : index
    %4 = vector.load %arg4[%c0_5, %c0_6, %c0_7] : memref<1x1x8xf32, #tpu.memory_space<vmem>>, vector<1x1x8xf32>
    %5 = vector.shape_cast %4 : vector<1x1x8xf32> to vector<1x8xf32>
    %6 = arith.truncf %1 : vector<8x32xf32> to vector<8x32xbf16>
    %7 = arith.truncf %3 : vector<8x32xf32> to vector<8x32xbf16>
    %c0_8 = arith.constant 0 : index
    %c0_9 = arith.constant 0 : index
    %8 = vector.load %arg5[%c0_8, %c0_9] : memref<32x32xbf16, #tpu.memory_space<vmem>>, vector<32x32xbf16>
    %cst = arith.constant dense<0.000000e+00> : vector<8x32xf32>
    %9 = tpu.matmul %6, %8, %cst {dimension_numbers = #tpu.dot_dimension_numbers<[1], [0], [0], [1], [0, 0, 1, 1], [], []>} : vector<8x32xbf16>, vector<32x32xbf16>, vector<8x32xf32> -> vector<8x32xf32>
    %c0_10 = arith.constant 0 : index
    %c0_11 = arith.constant 0 : index
    %10 = vector.load %arg6[%c0_10, %c0_11] : memref<1x32xf32, #tpu.memory_space<vmem>>, vector<1x32xf32>
    %11 = vector.shape_cast %10 : vector<1x32xf32> to vector<32xf32>
    %12 = vector.shape_cast %11 : vector<32xf32> to vector<1x32xf32>
    %13 = vector.broadcast %12 : vector<1x32xf32> to vector<8x32xf32>
    %14 = arith.addf %9, %13 : vector<8x32xf32>
    %15 = arith.truncf %14 : vector<8x32xf32> to vector<8x32xbf16>
    %c0_12 = arith.constant 0 : index
    %c0_13 = arith.constant 0 : index
    %16 = vector.load %arg7[%c0_12, %c0_13] : memref<32x32xbf16, #tpu.memory_space<vmem>>, vector<32x32xbf16>
    %cst_14 = arith.constant dense<0.000000e+00> : vector<8x32xf32>
    %17 = tpu.matmul %7, %16, %cst_14 {dimension_numbers = #tpu.dot_dimension_numbers<[1], [0], [0], [1], [0, 0, 1, 1], [], []>} : vector<8x32xbf16>, vector<32x32xbf16>, vector<8x32xf32> -> vector<8x32xf32>
    %c0_15 = arith.constant 0 : index
    %c0_16 = arith.constant 0 : index
    %18 = vector.load %arg8[%c0_15, %c0_16] : memref<1x32xf32, #tpu.memory_space<vmem>>, vector<1x32xf32>
    %19 = vector.shape_cast %18 : vector<1x32xf32> to vector<32xf32>
    %20 = vector.shape_cast %19 : vector<32xf32> to vector<1x32xf32>
    %21 = vector.broadcast %20 : vector<1x32xf32> to vector<8x32xf32>
    %22 = arith.addf %17, %21 : vector<8x32xf32>
    %23 = arith.truncf %22 : vector<8x32xf32> to vector<8x32xbf16>
    %c0_17 = arith.constant 0 : index
    %c0_18 = arith.constant 0 : index
    %24 = vector.load %arg9[%c0_17, %c0_18] : memref<32x32xbf16, #tpu.memory_space<vmem>>, vector<32x32xbf16>
    %cst_19 = arith.constant dense<0.000000e+00> : vector<8x32xf32>
    %25 = tpu.matmul %7, %24, %cst_19 {dimension_numbers = #tpu.dot_dimension_numbers<[1], [0], [0], [1], [0, 0, 1, 1], [], []>} : vector<8x32xbf16>, vector<32x32xbf16>, vector<8x32xf32> -> vector<8x32xf32>
    %c0_20 = arith.constant 0 : index
    %c0_21 = arith.constant 0 : index
    %26 = vector.load %arg10[%c0_20, %c0_21] : memref<1x32xf32, #tpu.memory_space<vmem>>, vector<1x32xf32>
    %27 = vector.shape_cast %26 : vector<1x32xf32> to vector<32xf32>
    %28 = vector.shape_cast %27 : vector<32xf32> to vector<1x32xf32>
    %29 = vector.broadcast %28 : vector<1x32xf32> to vector<8x32xf32>
    %30 = arith.addf %25, %29 : vector<8x32xf32>
    %31 = arith.truncf %30 : vector<8x32xf32> to vector<8x32xbf16>
    %32 = vector.extract_strided_slice %15 {offsets = [0, 0], sizes = [8, 8], strides = [1, 1]} : vector<8x32xbf16> to vector<8x8xbf16>
    %33 = vector.extract_strided_slice %23 {offsets = [0, 0], sizes = [8, 8], strides = [1, 1]} : vector<8x32xbf16> to vector<8x8xbf16>
    %34 = vector.extract_strided_slice %31 {offsets = [0, 0], sizes = [8, 8], strides = [1, 1]} : vector<8x32xbf16> to vector<8x8xbf16>
    %cst_22 = arith.constant dense<0.000000e+00> : vector<8x8xf32>
    %35 = tpu.matmul %32, %33, %cst_22 {dimension_numbers = #tpu.dot_dimension_numbers<[1], [1], [0], [0], [0, 0, 1, 0], [], []>} : vector<8x8xbf16>, vector<8x8xbf16>, vector<8x8xf32> -> vector<8x8xf32>
    %36 = vector.broadcast %5 : vector<1x8xf32> to vector<8x8xf32>
    %37 = arith.addf %35, %36 : vector<8x8xf32>
    %cst_23 = arith.constant dense<0xFF800000> : vector<8xf32>
    %38 = vector.multi_reduction <maximumf>, %37, %cst_23 [1] : vector<8x8xf32> to vector<8xf32>
    %39 = vector.shape_cast %38 : vector<8xf32> to vector<8x1xf32>
    %40 = vector.broadcast %39 : vector<8x1xf32> to vector<8x8xf32>
    %41 = arith.subf %37, %40 : vector<8x8xf32>
    %42 = math.exp %41 : vector<8x8xf32>
    %cst_24 = arith.constant dense<0.000000e+00> : vector<8xf32>
    %43 = vector.multi_reduction <add>, %42, %cst_24 [1] : vector<8x8xf32> to vector<8xf32>
    %44 = vector.shape_cast %43 : vector<8xf32> to vector<8x1xf32>
    %45 = tpu.reciprocal %44 {approx = true} : vector<8x1xf32> -> vector<8x1xf32>
    %46 = vector.broadcast %45 : vector<8x1xf32> to vector<8x8xf32>
    %47 = arith.mulf %42, %46 : vector<8x8xf32>
    %48 = arith.truncf %47 : vector<8x8xf32> to vector<8x8xbf16>
    %cst_25 = arith.constant dense<0.000000e+00> : vector<8x8xf32>
    %49 = tpu.matmul %48, %34, %cst_25 {dimension_numbers = #tpu.dot_dimension_numbers<[1], [0], [0], [1], [0, 0, 1, 1], [], []>} : vector<8x8xbf16>, vector<8x8xbf16>, vector<8x8xf32> -> vector<8x8xf32>
    %50 = arith.truncf %49 : vector<8x8xf32> to vector<8x8xbf16>
    %c0_26 = arith.constant 0 : index
    %c0_27 = arith.constant 0 : index
    %51 = vector.load %arg16[%c0_26, %c0_27] : memref<8x32xbf16, #tpu.memory_space<vmem>>, vector<8x8xbf16>
    tpu.vector_store %arg16[%c0_26, %c0_27], %50 {strides = array<i32>} : memref<8x32xbf16, #tpu.memory_space<vmem>>, vector<8x8xbf16>,
    %52 = vector.extract_strided_slice %15 {offsets = [0, 8], sizes = [8, 8], strides = [1, 1]} : vector<8x32xbf16> to vector<8x8xbf16>
    %53 = vector.extract_strided_slice %23 {offsets = [0, 8], sizes = [8, 8], strides = [1, 1]} : vector<8x32xbf16> to vector<8x8xbf16>
    %54 = vector.extract_strided_slice %31 {offsets = [0, 8], sizes = [8, 8], strides = [1, 1]} : vector<8x32xbf16> to vector<8x8xbf16>
    %cst_28 = arith.constant dense<0.000000e+00> : vector<8x8xf32>
    %55 = tpu.matmul %52, %53, %cst_28 {dimension_numbers = #tpu.dot_dimension_numbers<[1], [1], [0], [0], [0, 0, 1, 0], [], []>} : vector<8x8xbf16>, vector<8x8xbf16>, vector<8x8xf32> -> vector<8x8xf32>
    %56 = vector.broadcast %5 : vector<1x8xf32> to vector<8x8xf32>
    %57 = arith.addf %55, %56 : vector<8x8xf32>
    %cst_29 = arith.constant dense<0xFF800000> : vector<8xf32>
    %58 = vector.multi_reduction <maximumf>, %57, %cst_29 [1] : vector<8x8xf32> to vector<8xf32>
    %59 = vector.shape_cast %58 : vector<8xf32> to vector<8x1xf32>
    %60 = vector.broadcast %59 : vector<8x1xf32> to vector<8x8xf32>
    %61 = arith.subf %57, %60 : vector<8x8xf32>
    %62 = math.exp %61 : vector<8x8xf32>
    %cst_30 = arith.constant dense<0.000000e+00> : vector<8xf32>
    %63 = vector.multi_reduction <add>, %62, %cst_30 [1] : vector<8x8xf32> to vector<8xf32>
    %64 = vector.shape_cast %63 : vector<8xf32> to vector<8x1xf32>
    %65 = tpu.reciprocal %64 {approx = true} : vector<8x1xf32> -> vector<8x1xf32>
    %66 = vector.broadcast %65 : vector<8x1xf32> to vector<8x8xf32>
    %67 = arith.mulf %62, %66 : vector<8x8xf32>
    %68 = arith.truncf %67 : vector<8x8xf32> to vector<8x8xbf16>
    %cst_31 = arith.constant dense<0.000000e+00> : vector<8x8xf32>
    %69 = tpu.matmul %68, %54, %cst_31 {dimension_numbers = #tpu.dot_dimension_numbers<[1], [0], [0], [1], [0, 0, 1, 1], [], []>} : vector<8x8xbf16>, vector<8x8xbf16>, vector<8x8xf32> -> vector<8x8xf32>
    %70 = arith.truncf %69 : vector<8x8xf32> to vector<8x8xbf16>
    %c0_32 = arith.constant 0 : index
    %c8 = arith.constant 8 : index
    %71 = vector.load %arg16[%c0_32, %c8] : memref<8x32xbf16, #tpu.memory_space<vmem>>, vector<8x8xbf16>
    tpu.vector_store %arg16[%c0_32, %c8], %70 {strides = array<i32>} : memref<8x32xbf16, #tpu.memory_space<vmem>>, vector<8x8xbf16>,
    %72 = vector.extract_strided_slice %15 {offsets = [0, 16], sizes = [8, 8], strides = [1, 1]} : vector<8x32xbf16> to vector<8x8xbf16>
    %73 = vector.extract_strided_slice %23 {offsets = [0, 16], sizes = [8, 8], strides = [1, 1]} : vector<8x32xbf16> to vector<8x8xbf16>
    %74 = vector.extract_strided_slice %31 {offsets = [0, 16], sizes = [8, 8], strides = [1, 1]} : vector<8x32xbf16> to vector<8x8xbf16>
    %cst_33 = arith.constant dense<0.000000e+00> : vector<8x8xf32>
    %75 = tpu.matmul %72, %73, %cst_33 {dimension_numbers = #tpu.dot_dimension_numbers<[1], [1], [0], [0], [0, 0, 1, 0], [], []>} : vector<8x8xbf16>, vector<8x8xbf16>, vector<8x8xf32> -> vector<8x8xf32>
    %76 = vector.broadcast %5 : vector<1x8xf32> to vector<8x8xf32>
    %77 = arith.addf %75, %76 : vector<8x8xf32>
    %cst_34 = arith.constant dense<0xFF800000> : vector<8xf32>
    %78 = vector.multi_reduction <maximumf>, %77, %cst_34 [1] : vector<8x8xf32> to vector<8xf32>
    %79 = vector.shape_cast %78 : vector<8xf32> to vector<8x1xf32>
    %80 = vector.broadcast %79 : vector<8x1xf32> to vector<8x8xf32>
    %81 = arith.subf %77, %80 : vector<8x8xf32>
    %82 = math.exp %81 : vector<8x8xf32>
    %cst_35 = arith.constant dense<0.000000e+00> : vector<8xf32>
    %83 = vector.multi_reduction <add>, %82, %cst_35 [1] : vector<8x8xf32> to vector<8xf32>
    %84 = vector.shape_cast %83 : vector<8xf32> to vector<8x1xf32>
    %85 = tpu.reciprocal %84 {approx = true} : vector<8x1xf32> -> vector<8x1xf32>
    %86 = vector.broadcast %85 : vector<8x1xf32> to vector<8x8xf32>
    %87 = arith.mulf %82, %86 : vector<8x8xf32>
    %88 = arith.truncf %87 : vector<8x8xf32> to vector<8x8xbf16>
    %cst_36 = arith.constant dense<0.000000e+00> : vector<8x8xf32>
    %89 = tpu.matmul %88, %74, %cst_36 {dimension_numbers = #tpu.dot_dimension_numbers<[1], [0], [0], [1], [0, 0, 1, 1], [], []>} : vector<8x8xbf16>, vector<8x8xbf16>, vector<8x8xf32> -> vector<8x8xf32>
    %90 = arith.truncf %89 : vector<8x8xf32> to vector<8x8xbf16>
    %c0_37 = arith.constant 0 : index
    %c16 = arith.constant 16 : index
    %91 = vector.load %arg16[%c0_37, %c16] : memref<8x32xbf16, #tpu.memory_space<vmem>>, vector<8x8xbf16>
    tpu.vector_store %arg16[%c0_37, %c16], %90 {strides = array<i32>} : memref<8x32xbf16, #tpu.memory_space<vmem>>, vector<8x8xbf16>,
    %92 = vector.extract_strided_slice %15 {offsets = [0, 24], sizes = [8, 8], strides = [1, 1]} : vector<8x32xbf16> to vector<8x8xbf16>
    %93 = vector.extract_strided_slice %23 {offsets = [0, 24], sizes = [8, 8], strides = [1, 1]} : vector<8x32xbf16> to vector<8x8xbf16>
    %94 = vector.extract_strided_slice %31 {offsets = [0, 24], sizes = [8, 8], strides = [1, 1]} : vector<8x32xbf16> to vector<8x8xbf16>
    %cst_38 = arith.constant dense<0.000000e+00> : vector<8x8xf32>
    %95 = tpu.matmul %92, %93, %cst_38 {dimension_numbers = #tpu.dot_dimension_numbers<[1], [1], [0], [0], [0, 0, 1, 0], [], []>} : vector<8x8xbf16>, vector<8x8xbf16>, vector<8x8xf32> -> vector<8x8xf32>
    %96 = vector.broadcast %5 : vector<1x8xf32> to vector<8x8xf32>
    %97 = arith.addf %95, %96 : vector<8x8xf32>
    %cst_39 = arith.constant dense<0xFF800000> : vector<8xf32>
    %98 = vector.multi_reduction <maximumf>, %97, %cst_39 [1] : vector<8x8xf32> to vector<8xf32>
    %99 = vector.shape_cast %98 : vector<8xf32> to vector<8x1xf32>
    %100 = vector.broadcast %99 : vector<8x1xf32> to vector<8x8xf32>
    %101 = arith.subf %97, %100 : vector<8x8xf32>
    %102 = math.exp %101 : vector<8x8xf32>
    %cst_40 = arith.constant dense<0.000000e+00> : vector<8xf32>
    %103 = vector.multi_reduction <add>, %102, %cst_40 [1] : vector<8x8xf32> to vector<8xf32>
    %104 = vector.shape_cast %103 : vector<8xf32> to vector<8x1xf32>
    %105 = tpu.reciprocal %104 {approx = true} : vector<8x1xf32> -> vector<8x1xf32>
    %106 = vector.broadcast %105 : vector<8x1xf32> to vector<8x8xf32>
    %107 = arith.mulf %102, %106 : vector<8x8xf32>
    %108 = arith.truncf %107 : vector<8x8xf32> to vector<8x8xbf16>
    %cst_41 = arith.constant dense<0.000000e+00> : vector<8x8xf32>
    %109 = tpu.matmul %108, %94, %cst_41 {dimension_numbers = #tpu.dot_dimension_numbers<[1], [0], [0], [1], [0, 0, 1, 1], [], []>} : vector<8x8xbf16>, vector<8x8xbf16>, vector<8x8xf32> -> vector<8x8xf32>
    %110 = arith.truncf %109 : vector<8x8xf32> to vector<8x8xbf16>
    %c0_42 = arith.constant 0 : index
    %c24 = arith.constant 24 : index
    %111 = vector.load %arg16[%c0_42, %c24] : memref<8x32xbf16, #tpu.memory_space<vmem>>, vector<8x8xbf16>
    tpu.vector_store %arg16[%c0_42, %c24], %110 {strides = array<i32>} : memref<8x32xbf16, #tpu.memory_space<vmem>>, vector<8x8xbf16>,
    %c0_43 = arith.constant 0 : index
    %c0_44 = arith.constant 0 : index
    %112 = vector.load %arg16[%c0_43, %c0_44] : memref<8x32xbf16, #tpu.memory_space<vmem>>, vector<8x32xbf16>
    %c0_45 = arith.constant 0 : index
    %c0_46 = arith.constant 0 : index
    %113 = vector.load %arg11[%c0_45, %c0_46] : memref<32x32xbf16, #tpu.memory_space<vmem>>, vector<32x32xbf16>
    %cst_47 = arith.constant dense<0.000000e+00> : vector<8x32xf32>
    %114 = tpu.matmul %112, %113, %cst_47 {dimension_numbers = #tpu.dot_dimension_numbers<[1], [0], [0], [1], [0, 0, 1, 1], [], []>} : vector<8x32xbf16>, vector<32x32xbf16>, vector<8x32xf32> -> vector<8x32xf32>
    %c0_48 = arith.constant 0 : index
    %c0_49 = arith.constant 0 : index
    %115 = vector.load %arg12[%c0_48, %c0_49] : memref<1x32xf32, #tpu.memory_space<vmem>>, vector<1x32xf32>
    %116 = vector.shape_cast %115 : vector<1x32xf32> to vector<32xf32>
    %117 = vector.shape_cast %116 : vector<32xf32> to vector<1x32xf32>
    %118 = vector.broadcast %117 : vector<1x32xf32> to vector<8x32xf32>
    %119 = arith.addf %114, %118 : vector<8x32xf32>
    %120 = arith.addf %119, %1 : vector<8x32xf32>
    %c0_50 = arith.constant 0 : index
    %c0_51 = arith.constant 0 : index
    %121 = vector.load %arg13[%c0_50, %c0_51] : memref<1x32xf32, #tpu.memory_space<vmem>>, vector<1x32xf32>
    %122 = vector.shape_cast %121 : vector<1x32xf32> to vector<32xf32>
    %c0_52 = arith.constant 0 : index
    %c0_53 = arith.constant 0 : index
    %123 = vector.load %arg14[%c0_52, %c0_53] : memref<1x32xf32, #tpu.memory_space<vmem>>, vector<1x32xf32>
    %124 = vector.shape_cast %123 : vector<1x32xf32> to vector<32xf32>
    %cst_54 = arith.constant dense<0.000000e+00> : vector<8xf32>
    %125 = vector.multi_reduction <add>, %120, %cst_54 [1] : vector<8x32xf32> to vector<8xf32>
    %126 = vector.shape_cast %125 : vector<8xf32> to vector<8x1xf32>
    %cst_55 = arith.constant 3.200000e+01 : f32
    %127 = vector.broadcast %cst_55 : f32 to vector<8x1xf32>
    %128 = arith.divf %126, %127 : vector<8x1xf32>
    %129 = vector.broadcast %128 : vector<8x1xf32> to vector<8x32xf32>
    %130 = arith.subf %120, %129 : vector<8x32xf32>
    %131 = arith.mulf %130, %130 : vector<8x32xf32>
    %cst_56 = arith.constant dense<0.000000e+00> : vector<8xf32>
    %132 = vector.multi_reduction <add>, %131, %cst_56 [1] : vector<8x32xf32> to vector<8xf32>
    %133 = vector.shape_cast %132 : vector<8xf32> to vector<8x1xf32>
    %cst_57 = arith.constant 3.200000e+01 : f32
    %134 = vector.broadcast %cst_57 : f32 to vector<8x1xf32>
    %135 = arith.divf %133, %134 : vector<8x1xf32>
    %136 = vector.broadcast %128 : vector<8x1xf32> to vector<8x32xf32>
    %137 = arith.subf %120, %136 : vector<8x32xf32>
    %cst_58 = arith.constant 9.99999996E-13 : f32
    %138 = vector.broadcast %cst_58 : f32 to vector<8x1xf32>
    %139 = arith.addf %135, %138 : vector<8x1xf32>
    %140 = math.rsqrt %139 : vector<8x1xf32>
    %141 = vector.broadcast %140 : vector<8x1xf32> to vector<8x32xf32>
    %142 = arith.mulf %137, %141 : vector<8x32xf32>
    %143 = vector.shape_cast %122 : vector<32xf32> to vector<1x32xf32>
    %144 = vector.broadcast %143 : vector<1x32xf32> to vector<8x32xf32>
    %145 = arith.mulf %142, %144 : vector<8x32xf32>
    %146 = vector.shape_cast %124 : vector<32xf32> to vector<1x32xf32>
    %147 = vector.broadcast %146 : vector<1x32xf32> to vector<8x32xf32>
    %148 = arith.addf %145, %147 : vector<8x32xf32>
    %c0_59 = arith.constant 0 : index
    %c0_60 = arith.constant 0 : index
    %c0_61 = arith.constant 0 : index
    %149 = vector.load %arg15[%c0_59, %c0_60, %c0_61] : memref<1x8x32xf32, #tpu.memory_space<vmem>>, vector<1x8x32xf32>
    %150 = vector.shape_cast %149 : vector<1x8x32xf32> to vector<8x32xf32>
    %151 = vector.shape_cast %148 : vector<8x32xf32> to vector<1x8x32xf32>
    tpu.vector_store %arg15[%c0_59, %c0_60, %c0_61], %151 {strides = array<i32>} : memref<1x8x32xf32, #tpu.memory_space<vmem>>, vector<1x8x32xf32>,
    return
  }
  func.func @transform_0(%arg0: i32, %arg1: i32) -> (i32, i32, i32) {
    %c0_i32 = arith.constant 0 : i32
    %c0_i32_0 = arith.constant 0 : i32
    return %arg0, %arg1, %c0_i32 : i32, i32, i32
  }
  func.func @transform_1(%arg0: i32, %arg1: i32) -> (i32, i32, i32) {
    %c0_i32 = arith.constant 0 : i32
    %c0_i32_0 = arith.constant 0 : i32
    %c0_i32_1 = arith.constant 0 : i32
    return %arg0, %c0_i32, %c0_i32_0 : i32, i32, i32
  }
  func.func @transform_2(%arg0: i32, %arg1: i32) -> (i32, i32, i32) {
    %c0_i32 = arith.constant 0 : i32
    %c0_i32_0 = arith.constant 0 : i32
    %c0_i32_1 = arith.constant 0 : i32
    return %arg0, %c0_i32, %c0_i32_0 : i32, i32, i32
  }
  func.func @transform_3(%arg0: i32, %arg1: i32) -> (i32, i32) {
    %c0_i32 = arith.constant 0 : i32
    %c0_i32_0 = arith.constant 0 : i32
    %c0_i32_1 = arith.constant 0 : i32
    return %c0_i32, %c0_i32_0 : i32, i32
  }
  func.func @transform_4(%arg0: i32, %arg1: i32) -> (i32, i32) {
    %c0_i32 = arith.constant 0 : i32
    %c0_i32_0 = arith.constant 0 : i32
    %c0_i32_1 = arith.constant 0 : i32
    return %c0_i32, %c0_i32_0 : i32, i32
  }
  func.func @transform_5(%arg0: i32, %arg1: i32) -> (i32, i32) {
    %c0_i32 = arith.constant 0 : i32
    %c0_i32_0 = arith.constant 0 : i32
    %c0_i32_1 = arith.constant 0 : i32
    return %c0_i32, %c0_i32_0 : i32, i32
  }
  func.func @transform_6(%arg0: i32, %arg1: i32) -> (i32, i32) {
    %c0_i32 = arith.constant 0 : i32
    %c0_i32_0 = arith.constant 0 : i32
    %c0_i32_1 = arith.constant 0 : i32
    return %c0_i32, %c0_i32_0 : i32, i32
  }
  func.func @transform_7(%arg0: i32, %arg1: i32) -> (i32, i32) {
    %c0_i32 = arith.constant 0 : i32
    %c0_i32_0 = arith.constant 0 : i32
    %c0_i32_1 = arith.constant 0 : i32
    return %c0_i32, %c0_i32_0 : i32, i32
  }
  func.func @transform_8(%arg0: i32, %arg1: i32) -> (i32, i32) {
    %c0_i32 = arith.constant 0 : i32
    %c0_i32_0 = arith.constant 0 : i32
    %c0_i32_1 = arith.constant 0 : i32
    return %c0_i32, %c0_i32_0 : i32, i32
  }
  func.func @transform_9(%arg0: i32, %arg1: i32) -> (i32, i32) {
    %c0_i32 = arith.constant 0 : i32
    %c0_i32_0 = arith.constant 0 : i32
    %c0_i32_1 = arith.constant 0 : i32
    return %c0_i32, %c0_i32_0 : i32, i32
  }
  func.func @transform_10(%arg0: i32, %arg1: i32) -> (i32, i32) {
    %c0_i32 = arith.constant 0 : i32
    %c0_i32_0 = arith.constant 0 : i32
    %c0_i32_1 = arith.constant 0 : i32
    return %c0_i32, %c0_i32_0 : i32, i32
  }
  func.func @transform_11(%arg0: i32, %arg1: i32) -> (i32, i32) {
    %c0_i32 = arith.constant 0 : i32
    %c0_i32_0 = arith.constant 0 : i32
    %c0_i32_1 = arith.constant 0 : i32
    return %c0_i32, %c0_i32_0 : i32, i32
  }
  func.func @transform_12(%arg0: i32, %arg1: i32) -> (i32, i32) {
    %c0_i32 = arith.constant 0 : i32
    %c0_i32_0 = arith.constant 0 : i32
    %c0_i32_1 = arith.constant 0 : i32
    return %c0_i32, %c0_i32_0 : i32, i32
  }
  func.func @transform_13(%arg0: i32, %arg1: i32) -> (i32, i32, i32) {
    %c0_i32 = arith.constant 0 : i32
    %c0_i32_0 = arith.constant 0 : i32
    return %arg0, %arg1, %c0_i32 : i32, i32, i32
  }
}

</mosaic_0001>

<llo_original>
// kernel: tpu_custom_call.1
$region0: #{tpu_custom_call.1}
  #allocation0 [shape = 'u32[]', space=smem, size = 0x4, offset = 0x4, fixed_abs, tag = 'smem constant byte address 0x4 - core index']
  #allocation1 [shape = 'u32[144,128]{1,0:T(1,128)}', space=vmem, size = 0x12000, scoped, tag = 'internal scratch']
  #allocation2 [shape = 'bf16[8,32]{1,0:T(8,128)(2,1)}', space=vmem, size = 0x800, scoped, tag = 'scratch operand']
  %s0 = inlined_call_operand.hbm [shape: f32[2,8,32], index: 0, kind: input, shape index: {}]
  %s1 = inlined_call_operand.hbm [shape: f32[2,8,32], index: 1, kind: input, shape index: {}]
  %s2 = inlined_call_operand.hbm [shape: f32[2,1,8], index: 2, kind: input, shape index: {}]
  %s3 = inlined_call_operand.hbm [shape: bf16[32,32], index: 3, kind: input, shape index: {}]
  %s4 = inlined_call_operand.hbm [shape: f32[1,32], index: 4, kind: input, shape index: {}]
  %s5 = inlined_call_operand.hbm [shape: bf16[32,32], index: 5, kind: input, shape index: {}]
  %s6 = inlined_call_operand.hbm [shape: f32[1,32], index: 6, kind: input, shape index: {}]
  %s7 = inlined_call_operand.hbm [shape: bf16[32,32], index: 7, kind: input, shape index: {}]
  %s8 = inlined_call_operand.hbm [shape: f32[1,32], index: 8, kind: input, shape index: {}]
  %s9 = inlined_call_operand.vmem [shape: bf16[32,32], index: 9, kind: input, shape index: {}]
  %s10 = inlined_call_operand.vmem [shape: f32[1,32], index: 10, kind: input, shape index: {}]
  %s11 = inlined_call_operand.vmem [shape: f32[1,32], index: 11, kind: input, shape index: {}]
  %s12 = inlined_call_operand.vmem [shape: f32[1,32], index: 12, kind: input, shape index: {}]
  %s13 = inlined_call_operand.hbm [shape: f32[2,8,32], index: 13, kind: output, shape index: {}]
  %s14 = sld [smem:[#allocation0]]
  $region121: #{tpu_custom_call.1} parent=0
    _
  %s16 = ssub.s32 1, %s14
  %s17 = scalar_select 0, %s16, %s14
  $region1: #{tpu_custom_call.1} parent=0
    #allocation3 [shape = 'u8[8192]{0}', space=vmem, size = 0x2000, scoped, tag = 'input window, operand 0']
    #allocation4 [shape = 's32[2]{0}', space=sflag, size = 0x8, scoped, tag = 'scoped memory for tpu_custom_call.1']
    #allocation5 [shape = 's32[2]{0}', space=sflag, size = 0x8, scoped, tag = 'scoped memory for tpu_custom_call.1']
    #allocation6 [shape = 'u8[8192]{0}', space=vmem, size = 0x2000, scoped, tag = 'input window, operand 1']
    #allocation7 [shape = 's32[2]{0}', space=sflag, size = 0x8, scoped, tag = 'scoped memory for tpu_custom_call.1']
    #allocation8 [shape = 'u8[1024]{0}', space=vmem, size = 0x400, scoped, tag = 'input window, operand 2']
    #allocation9 [shape = 'u8[8192]{0}', space=vmem, size = 0x2000, scoped, tag = 'input window, operand 3, single buffered']
    #allocation10 [shape = 's32[1]{0}', space=sflag, size = 0x4, scoped, tag = 'scoped memory for tpu_custom_call.1']
    #allocation11 [shape = 'u8[512]{0}', space=vmem, size = 0x400, scoped, tag = 'input window, operand 4, single buffered']
    #allocation12 [shape = 'u8[8192]{0}', space=vmem, size = 0x2000, scoped, tag = 'input window, operand 5, single buffered']
    #allocation13 [shape = 's32[1]{0}', space=sflag, size = 0x4, scoped, tag = 'scoped memory for tpu_custom_call.1']
    #allocation14 [shape = 'u8[512]{0}', space=vmem, size = 0x400, scoped, tag = 'input window, operand 6, single buffered']
    #allocation15 [shape = 'u8[8192]{0}', space=vmem, size = 0x2000, scoped, tag = 'input window, operand 7, single buffered']
    #allocation16 [shape = 's32[1]{0}', space=sflag, size = 0x4, scoped, tag = 'scoped memory for tpu_custom_call.1']
    #allocation17 [shape = 'u8[512]{0}', space=vmem, size = 0x400, scoped, tag = 'input window, operand 8, single buffered']
    #allocation18 [shape = 'u8[8192]{0}', space=vmem, size = 0x2000, scoped, tag = 'output window, operand 0']
    %18 = vsyncpa [#allocation4], 0
    %s19 = scalar_lea.sflag [#allocation4], 1
    %20 = vsyncpa %s19, 0
    %21 = vsyncpa [#allocation7], 0
    %s22 = scalar_lea.sflag [#allocation7], 1
    %23 = vsyncpa %s22, 0
    %24 = vsyncpa [#allocation10], 0
    %25 = vsyncpa [#allocation13], 0
    %26 = vsyncpa [#allocation16], 0
    %27 = vsyncpa [#allocation5], 0
    %s28 = scalar_lea.sflag [#allocation5], 1
    %29 = vsyncpa %s28, 0
    loop: start=0, step=1, limit=4
    $region2: #{tpu_custom_call.1} parent=1 // loop_pre_header
      _
    $region3: #{tpu_custom_call.1} parent=1 // loop_header
      %s31 = sphi 0, %s35
      %p32 = scmp.ge.s32.totalorder %s31, 4
      %s38 = sphi 0, %s50
      %s39 = sphi 0, %s46
      %s40 = sphi 0, %s38
      %s41 = sphi 0, %s39
      %s42 = sphi 0, %s40
      %s43 = sphi 0, %s41
      %s55 = sphi 0, %s57
      %s58 = sphi 0, %s55
      %s59 = sphi 0, %s58
      %s75 = sphi 0, %s59
      %s81 = sphi 0, %s83
      %s84 = sphi 0, %s81
      %s85 = sphi 0, %s84
      %s101 = sphi 0, %s85
      %s107 = sphi 0, %s109
      %s110 = sphi 0, %s107
      %s111 = sphi 0, %s110
      %s127 = sphi 0, %s111
      %s131 = sphi 0, %s131
      %s133 = sphi 0, %s131
      %s134 = sphi 0, %s133
      %s148 = sphi 0, %s134
      %s152 = sphi 0, %s152
      %s154 = sphi 0, %s152
      %s155 = sphi 0, %s154
      %s169 = sphi 0, %s155
      %s173 = sphi 0, %s173
      %s175 = sphi 0, %s173
      %s176 = sphi 0, %s175
      %s190 = sphi 0, %s176
      %s194 = sphi 0, %s194
      %s196 = sphi 0, %s194
      %s197 = sphi 0, %s196
      %s211 = sphi 0, %s197
      %s215 = sphi 0, %s215
      %s217 = sphi 0, %s215
      %s218 = sphi 0, %s217
      %s232 = sphi 0, %s218
      %s236 = sphi 0, %s236
      %s238 = sphi 0, %s236
      %s239 = sphi 0, %s238
      %s253 = sphi 0, %s239
      %s257 = sphi 0, %s257
      %s259 = sphi 0, %s257
      %s260 = sphi 0, %s259
      %s274 = sphi 0, %s260
      %s278 = sphi 0, %s278
      %s280 = sphi 0, %s278
      %s281 = sphi 0, %s280
      %s295 = sphi 0, %s281
      %s299 = sphi 0, %s299
      %s301 = sphi 0, %s299
      %s302 = sphi 0, %s301
      %s316 = sphi 0, %s302
      %s320 = sphi 0, %s320
      %s322 = sphi 0, %s320
      %s323 = sphi 0, %s322
      %s337 = sphi 0, %s323
      %s345 = sphi 0, %s347
      %s348 = sphi 0, %s345
      %s349 = sphi 0, %s348
      %s365 = sphi 0, %s349
    $region4: #{tpu_custom_call.1} parent=1 // loop_header_branch
      %34 = sbr.rel (%p32) target = $region8
    $region5: #{tpu_custom_call.1} parent=1 // loop_body
      %s36 = ssub.s32 %s31, 1
      %s37 = ssub.s32 %s31, 2
      %s44 = sadd.s32 1, %s39
      %p45 = scmp.ge.s32.totalorder %s44, 1
      %s46 = scalar_select %p45, 0, %s44
      %s47 = sadd.s32 1, %s38
      %s48 = scalar_select %p45, %s47, %s38
      %p49 = scmp.ge.s32.totalorder %s48, 2
      %s50 = scalar_select %p49, 0, %s48
      %s51 = ssub.s32 %s38, %s50
      %s52 = ssub.s32 %s39, %s46
      %s53 = sor.u32 %s51, %s52
      %p54 = scmp.eq.s32.totalorder %s53, 0
      %s56 = sadd.s32 %s55, 1
      %s57 = scalar_select %p54, %s55, %s56
      %p60 = pneg %p54
      %p61 = scmp.eq.s32.totalorder %s31, 1
      %p62 = por %p60, %p61
      %p63 = scmp.ne.s32.totalorder %s55, %s58
      %p64 = scmp.eq.s32.totalorder %s31, 0
      %p65 = por %p63, %p64
      %p66 = scmp.ne.s32.totalorder %s55, %s58
      %p67 = scmp.eq.s32.totalorder %s36, 1
      %p68 = por %p66, %p67
      %p69 = scmp.ne.s32.totalorder %s58, %s59
      %p70 = scmp.eq.s32.totalorder %s36, 0
      %p71 = por %p69, %p70
      %p72 = scmp.ne.s32.totalorder %s58, %s59
      %p73 = scmp.eq.s32.totalorder %s37, 1
      %p74 = por %p72, %p73
      %p76 = scmp.ne.s32.totalorder %s59, %s75
      %p77 = scmp.eq.s32.totalorder %s37, 0
      %p78 = por %p76, %p77
      %s79 = ssub.s32 %s38, %s50
      %p80 = scmp.eq.s32.totalorder %s79, 0
      %s82 = sadd.s32 %s81, 1
      %s83 = scalar_select %p80, %s81, %s82
      %p86 = pneg %p80
      %p87 = scmp.eq.s32.totalorder %s31, 1
      %p88 = por %p86, %p87
      %p89 = scmp.ne.s32.totalorder %s81, %s84
      %p90 = scmp.eq.s32.totalorder %s31, 0
      %p91 = por %p89, %p90
      %p92 = scmp.ne.s32.totalorder %s81, %s84
      %p93 = scmp.eq.s32.totalorder %s36, 1
      %p94 = por %p92, %p93
      %p95 = scmp.ne.s32.totalorder %s84, %s85
      %p96 = scmp.eq.s32.totalorder %s36, 0
      %p97 = por %p95, %p96
      %p98 = scmp.ne.s32.totalorder %s84, %s85
      %p99 = scmp.eq.s32.totalorder %s37, 1
      %p100 = por %p98, %p99
      %p102 = scmp.ne.s32.totalorder %s85, %s101
      %p103 = scmp.eq.s32.totalorder %s37, 0
      %p104 = por %p102, %p103
      %s105 = ssub.s32 %s38, %s50
      %p106 = scmp.eq.s32.totalorder %s105, 0
      %s108 = sadd.s32 %s107, 1
      %s109 = scalar_select %p106, %s107, %s108
      %p112 = pneg %p106
      %p113 = scmp.eq.s32.totalorder %s31, 1
      %p114 = por %p112, %p113
      %p115 = scmp.ne.s32.totalorder %s107, %s110
      %p116 = scmp.eq.s32.totalorder %s31, 0
      %p117 = por %p115, %p116
      %p118 = scmp.ne.s32.totalorder %s107, %s110
      %p119 = scmp.eq.s32.totalorder %s36, 1
      %p120 = por %p118, %p119
      %p121 = scmp.ne.s32.totalorder %s110, %s111
      %p122 = scmp.eq.s32.totalorder %s36, 0
      %p123 = por %p121, %p122
      %p124 = scmp.ne.s32.totalorder %s110, %s111
      %p125 = scmp.eq.s32.totalorder %s37, 1
      %p126 = por %p124, %p125
      %p128 = scmp.ne.s32.totalorder %s111, %s127
      %p129 = scmp.eq.s32.totalorder %s37, 0
      %p130 = por %p128, %p129
      %s132 = sadd.s32 %s131, 1
      %p135 = scmp.eq.s32.totalorder %s31, 1
      %p136 = scmp.ne.s32.totalorder %s131, %s133
      %p137 = scmp.eq.s32.totalorder %s31, 0
      %p138 = por %p136, %p137
      %p139 = scmp.ne.s32.totalorder %s131, %s133
      %p140 = scmp.eq.s32.totalorder %s36, 1
      %p141 = por %p139, %p140
      %p142 = scmp.ne.s32.totalorder %s133, %s134
      %p143 = scmp.eq.s32.totalorder %s36, 0
      %p144 = por %p142, %p143
      %p145 = scmp.ne.s32.totalorder %s133, %s134
      %p146 = scmp.eq.s32.totalorder %s37, 1
      %p147 = por %p145, %p146
      %p149 = scmp.ne.s32.totalorder %s134, %s148
      %p150 = scmp.eq.s32.totalorder %s37, 0
      %p151 = por %p149, %p150
      %s153 = sadd.s32 %s152, 1
      %p156 = scmp.eq.s32.totalorder %s31, 1
      %p157 = scmp.ne.s32.totalorder %s152, %s154
      %p158 = scmp.eq.s32.totalorder %s31, 0
      %p159 = por %p157, %p158
      %p160 = scmp.ne.s32.totalorder %s152, %s154
      %p161 = scmp.eq.s32.totalorder %s36, 1
      %p162 = por %p160, %p161
      %p163 = scmp.ne.s32.totalorder %s154, %s155
      %p164 = scmp.eq.s32.totalorder %s36, 0
      %p165 = por %p163, %p164
      %p166 = scmp.ne.s32.totalorder %s154, %s155
      %p167 = scmp.eq.s32.totalorder %s37, 1
      %p168 = por %p166, %p167
      %p170 = scmp.ne.s32.totalorder %s155, %s169
      %p171 = scmp.eq.s32.totalorder %s37, 0
      %p172 = por %p170, %p171
      %s174 = sadd.s32 %s173, 1
      %p177 = scmp.eq.s32.totalorder %s31, 1
      %p178 = scmp.ne.s32.totalorder %s173, %s175
      %p179 = scmp.eq.s32.totalorder %s31, 0
      %p180 = por %p178, %p179
      %p181 = scmp.ne.s32.totalorder %s173, %s175
      %p182 = scmp.eq.s32.totalorder %s36, 1
      %p183 = por %p181, %p182
      %p184 = scmp.ne.s32.totalorder %s175, %s176
      %p185 = scmp.eq.s32.totalorder %s36, 0
      %p186 = por %p184, %p185
      %p187 = scmp.ne.s32.totalorder %s175, %s176
      %p188 = scmp.eq.s32.totalorder %s37, 1
      %p189 = por %p187, %p188
      %p191 = scmp.ne.s32.totalorder %s176, %s190
      %p192 = scmp.eq.s32.totalorder %s37, 0
      %p193 = por %p191, %p192
      %s195 = sadd.s32 %s194, 1
      %p198 = scmp.eq.s32.totalorder %s31, 1
      %p199 = scmp.ne.s32.totalorder %s194, %s196
      %p200 = scmp.eq.s32.totalorder %s31, 0
      %p201 = por %p199, %p200
      %p202 = scmp.ne.s32.totalorder %s194, %s196
      %p203 = scmp.eq.s32.totalorder %s36, 1
      %p204 = por %p202, %p203
      %p205 = scmp.ne.s32.totalorder %s196, %s197
      %p206 = scmp.eq.s32.totalorder %s36, 0
      %p207 = por %p205, %p206
      %p208 = scmp.ne.s32.totalorder %s196, %s197
      %p209 = scmp.eq.s32.totalorder %s37, 1
      %p210 = por %p208, %p209
      %p212 = scmp.ne.s32.totalorder %s197, %s211
      %p213 = scmp.eq.s32.totalorder %s37, 0
      %p214 = por %p212, %p213
      %s216 = sadd.s32 %s215, 1
      %p219 = scmp.eq.s32.totalorder %s31, 1
      %p220 = scmp.ne.s32.totalorder %s215, %s217
      %p221 = scmp.eq.s32.totalorder %s31, 0
      %p222 = por %p220, %p221
      %p223 = scmp.ne.s32.totalorder %s215, %s217
      %p224 = scmp.eq.s32.totalorder %s36, 1
      %p225 = por %p223, %p224
      %p226 = scmp.ne.s32.totalorder %s217, %s218
      %p227 = scmp.eq.s32.totalorder %s36, 0
      %p228 = por %p226, %p227
      %p229 = scmp.ne.s32.totalorder %s217, %s218
      %p230 = scmp.eq.s32.totalorder %s37, 1
      %p231 = por %p229, %p230
      %p233 = scmp.ne.s32.totalorder %s218, %s232
      %p234 = scmp.eq.s32.totalorder %s37, 0
      %p235 = por %p233, %p234
      %s237 = sadd.s32 %s236, 1
      %p240 = scmp.eq.s32.totalorder %s31, 1
      %p241 = scmp.ne.s32.totalorder %s236, %s238
      %p242 = scmp.eq.s32.totalorder %s31, 0
      %p243 = por %p241, %p242
      %p244 = scmp.ne.s32.totalorder %s236, %s238
      %p245 = scmp.eq.s32.totalorder %s36, 1
      %p246 = por %p244, %p245
      %p247 = scmp.ne.s32.totalorder %s238, %s239
      %p248 = scmp.eq.s32.totalorder %s36, 0
      %p249 = por %p247, %p248
      %p250 = scmp.ne.s32.totalorder %s238, %s239
      %p251 = scmp.eq.s32.totalorder %s37, 1
      %p252 = por %p250, %p251
      %p254 = scmp.ne.s32.totalorder %s239, %s253
      %p255 = scmp.eq.s32.totalorder %s37, 0
      %p256 = por %p254, %p255
      %s258 = sadd.s32 %s257, 1
      %p261 = scmp.eq.s32.totalorder %s31, 1
      %p262 = scmp.ne.s32.totalorder %s257, %s259
      %p263 = scmp.eq.s32.totalorder %s31, 0
      %p264 = por %p262, %p263
      %p265 = scmp.ne.s32.totalorder %s257, %s259
      %p266 = scmp.eq.s32.totalorder %s36, 1
      %p267 = por %p265, %p266
      %p268 = scmp.ne.s32.totalorder %s259, %s260
      %p269 = scmp.eq.s32.totalorder %s36, 0
      %p270 = por %p268, %p269
      %p271 = scmp.ne.s32.totalorder %s259, %s260
      %p272 = scmp.eq.s32.totalorder %s37, 1
      %p273 = por %p271, %p272
      %p275 = scmp.ne.s32.totalorder %s260, %s274
      %p276 = scmp.eq.s32.totalorder %s37, 0
      %p277 = por %p275, %p276
      %s279 = sadd.s32 %s278, 1
      %p282 = scmp.eq.s32.totalorder %s31, 1
      %p283 = scmp.ne.s32.totalorder %s278, %s280
      %p284 = scmp.eq.s32.totalorder %s31, 0
      %p285 = por %p283, %p284
      %p286 = scmp.ne.s32.totalorder %s278, %s280
      %p287 = scmp.eq.s32.totalorder %s36, 1
      %p288 = por %p286, %p287
      %p289 = scmp.ne.s32.totalorder %s280, %s281
      %p290 = scmp.eq.s32.totalorder %s36, 0
      %p291 = por %p289, %p290
      %p292 = scmp.ne.s32.totalorder %s280, %s281
      %p293 = scmp.eq.s32.totalorder %s37, 1
      %p294 = por %p292, %p293
      %p296 = scmp.ne.s32.totalorder %s281, %s295
      %p297 = scmp.eq.s32.totalorder %s37, 0
      %p298 = por %p296, %p297
      %s300 = sadd.s32 %s299, 1
      %p303 = scmp.eq.s32.totalorder %s31, 1
      %p304 = scmp.ne.s32.totalorder %s299, %s301
      %p305 = scmp.eq.s32.totalorder %s31, 0
      %p306 = por %p304, %p305
      %p307 = scmp.ne.s32.totalorder %s299, %s301
      %p308 = scmp.eq.s32.totalorder %s36, 1
      %p309 = por %p307, %p308
      %p310 = scmp.ne.s32.totalorder %s301, %s302
      %p311 = scmp.eq.s32.totalorder %s36, 0
      %p312 = por %p310, %p311
      %p313 = scmp.ne.s32.totalorder %s301, %s302
      %p314 = scmp.eq.s32.totalorder %s37, 1
      %p315 = por %p313, %p314
      %p317 = scmp.ne.s32.totalorder %s302, %s316
      %p318 = scmp.eq.s32.totalorder %s37, 0
      %p319 = por %p317, %p318
      %s321 = sadd.s32 %s320, 1
      %p324 = scmp.eq.s32.totalorder %s31, 1
      %p325 = scmp.ne.s32.totalorder %s320, %s322
      %p326 = scmp.eq.s32.totalorder %s31, 0
      %p327 = por %p325, %p326
      %p328 = scmp.ne.s32.totalorder %s320, %s322
      %p329 = scmp.eq.s32.totalorder %s36, 1
      %p330 = por %p328, %p329
      %p331 = scmp.ne.s32.totalorder %s322, %s323
      %p332 = scmp.eq.s32.totalorder %s36, 0
      %p333 = por %p331, %p332
      %p334 = scmp.ne.s32.totalorder %s322, %s323
      %p335 = scmp.eq.s32.totalorder %s37, 1
      %p336 = por %p334, %p335
      %p338 = scmp.ne.s32.totalorder %s323, %s337
      %p339 = scmp.eq.s32.totalorder %s37, 0
      %p340 = por %p338, %p339
      %s341 = ssub.s32 %s38, %s50
      %s342 = ssub.s32 %s39, %s46
      %s343 = sor.u32 %s341, %s342
      %p344 = scmp.eq.s32.totalorder %s343, 0
      %s346 = sadd.s32 %s345, 1
      %s347 = scalar_select %p344, %s345, %s346
      %p350 = pneg %p344
      %p351 = scmp.eq.s32.totalorder %s31, 1
      %p352 = por %p350, %p351
      %p353 = scmp.ne.s32.totalorder %s345, %s348
      %p354 = scmp.eq.s32.totalorder %s31, 0
      %p355 = por %p353, %p354
      %p356 = scmp.ne.s32.totalorder %s345, %s348
      %p357 = scmp.eq.s32.totalorder %s36, 1
      %p358 = por %p356, %p357
      %p359 = scmp.ne.s32.totalorder %s348, %s349
      %p360 = scmp.eq.s32.totalorder %s36, 0
      %p361 = por %p359, %p360
      %p362 = scmp.ne.s32.totalorder %s348, %s349
      %p363 = scmp.eq.s32.totalorder %s37, 1
      %p364 = por %p362, %p363
      %p366 = scmp.ne.s32.totalorder %s349, %s365
      %p367 = scmp.eq.s32.totalorder %s37, 0
      %p368 = por %p366, %p367
      %p369 = scmp.le.s32.totalorder 1, %s31
      %p370 = scmp.lt.s32.totalorder %s31, 3
      %p371 = pnand %p369, %p370
      %p372 = pneg %p371
      // Predicated region
      $region9: #{tpu_custom_call.1} parent=5 // pred_check
        _
      $region10: #{tpu_custom_call.1} parent=5 // pred_check_branch
        %374 = sbr.rel (%p371) target = $region12
      $region11: #{tpu_custom_call.1} parent=5 // pred_region
        %s375 = ssub.s32 %s31, 1
        // Predicated region
        $region13: #{tpu_custom_call.1} parent=11 // pred_check
          %p376 = pneg %p144
        $region14: #{tpu_custom_call.1} parent=11 // pred_check_branch
          %378 = sbr.rel (%p376) target = $region16
        $region15: #{tpu_custom_call.1} parent=11 // pred_region
          %s380 = ssub.s32 256, 256
          %381 = vsyncadd [#allocation10], %s380
          %s382 = sshll.u32 [#allocation9], 4
          %s383 = int_to_ptr.vmem [resolvable:$true] %s382
          %388 = dma.hbm_to_vmem [thread:$0]  %s3, 256, %s383, [#allocation10], 64, 64, 4
        $region16: #{tpu_custom_call.1} parent=11 // pred_fallthru
          _
        // Predicated region
        $region17: #{tpu_custom_call.1} parent=11 // pred_check
          %p389 = pneg %p165
        $region18: #{tpu_custom_call.1} parent=11 // pred_check_branch
          %391 = sbr.rel (%p389) target = $region20
        $region19: #{tpu_custom_call.1} parent=11 // pred_region
          %s393 = ssub.s32 16, 16
          %394 = vsyncadd [#allocation10], %s393
          %s396 = sshll.u32 [#allocation11], 4
          %s397 = int_to_ptr.vmem [resolvable:$true] %s396
          %399 = dma.hbm_to_vmem [thread:$0]  %s4, 16, %s397, [#allocation10]
        $region20: #{tpu_custom_call.1} parent=11 // pred_fallthru
          _
        // Predicated region
        $region21: #{tpu_custom_call.1} parent=11 // pred_check
          %p400 = pneg %p186
        $region22: #{tpu_custom_call.1} parent=11 // pred_check_branch
          %402 = sbr.rel (%p400) target = $region24
        $region23: #{tpu_custom_call.1} parent=11 // pred_region
          %s404 = ssub.s32 256, 256
          %405 = vsyncadd [#allocation13], %s404
          %s406 = sshll.u32 [#allocation12], 4
          %s407 = int_to_ptr.vmem [resolvable:$true] %s406
          %412 = dma.hbm_to_vmem [thread:$0]  %s5, 256, %s407, [#allocation13], 64, 64, 4
        $region24: #{tpu_custom_call.1} parent=11 // pred_fallthru
          _
        // Predicated region
        $region25: #{tpu_custom_call.1} parent=11 // pred_check
          %p413 = pneg %p207
        $region26: #{tpu_custom_call.1} parent=11 // pred_check_branch
          %415 = sbr.rel (%p413) target = $region28
        $region27: #{tpu_custom_call.1} parent=11 // pred_region
          %s417 = ssub.s32 16, 16
          %418 = vsyncadd [#allocation13], %s417
          %s420 = sshll.u32 [#allocation14], 4
          %s421 = int_to_ptr.vmem [resolvable:$true] %s420
          %423 = dma.hbm_to_vmem [thread:$0]  %s6, 16, %s421, [#allocation13]
        $region28: #{tpu_custom_call.1} parent=11 // pred_fallthru
          _
        // Predicated region
        $region29: #{tpu_custom_call.1} parent=11 // pred_check
          %p424 = pneg %p228
        $region30: #{tpu_custom_call.1} parent=11 // pred_check_branch
          %426 = sbr.rel (%p424) target = $region32
        $region31: #{tpu_custom_call.1} parent=11 // pred_region
          %s428 = ssub.s32 256, 256
          %429 = vsyncadd [#allocation16], %s428
          %s430 = sshll.u32 [#allocation15], 4
          %s431 = int_to_ptr.vmem [resolvable:$true] %s430
          %436 = dma.hbm_to_vmem [thread:$0]  %s7, 256, %s431, [#allocation16], 64, 64, 4
        $region32: #{tpu_custom_call.1} parent=11 // pred_fallthru
          _
        // Predicated region
        $region33: #{tpu_custom_call.1} parent=11 // pred_check
          %p437 = pneg %p249
        $region34: #{tpu_custom_call.1} parent=11 // pred_check_branch
          %439 = sbr.rel (%p437) target = $region36
        $region35: #{tpu_custom_call.1} parent=11 // pred_region
          %s441 = ssub.s32 16, 16
          %442 = vsyncadd [#allocation16], %s441
          %s444 = sshll.u32 [#allocation17], 4
          %s445 = int_to_ptr.vmem [resolvable:$true] %s444
          %447 = dma.hbm_to_vmem [thread:$0]  %s8, 16, %s445, [#allocation16]
        $region36: #{tpu_custom_call.1} parent=11 // pred_fallthru
          _
        // Predicated region
        $region37: #{tpu_custom_call.1} parent=11 // pred_check
          %p448 = pneg %p270
        $region38: #{tpu_custom_call.1} parent=11 // pred_check_branch
          %450 = sbr.rel (%p448) target = $region40
        $region39: #{tpu_custom_call.1} parent=11 // pred_region
          _
        $region40: #{tpu_custom_call.1} parent=11 // pred_fallthru
          _
        // Predicated region
        $region41: #{tpu_custom_call.1} parent=11 // pred_check
          %p451 = pneg %p291
        $region42: #{tpu_custom_call.1} parent=11 // pred_check_branch
          %453 = sbr.rel (%p451) target = $region44
        $region43: #{tpu_custom_call.1} parent=11 // pred_region
          _
        $region44: #{tpu_custom_call.1} parent=11 // pred_fallthru
          _
        // Predicated region
        $region45: #{tpu_custom_call.1} parent=11 // pred_check
          %p454 = pneg %p312
        $region46: #{tpu_custom_call.1} parent=11 // pred_check_branch
          %456 = sbr.rel (%p454) target = $region48
        $region47: #{tpu_custom_call.1} parent=11 // pred_region
          _
        $region48: #{tpu_custom_call.1} parent=11 // pred_fallthru
          _
        // Predicated region
        $region49: #{tpu_custom_call.1} parent=11 // pred_check
          %p457 = pneg %p333
        $region50: #{tpu_custom_call.1} parent=11 // pred_check_branch
          %459 = sbr.rel (%p457) target = $region52
        $region51: #{tpu_custom_call.1} parent=11 // pred_region
          _
        $region52: #{tpu_custom_call.1} parent=11 // pred_fallthru
          _
      $region12: #{tpu_custom_call.1} parent=5 // pred_fallthru
        _
      %p460 = scmp.lt.s32.totalorder %s31, 2
      // Predicated region
      $region53: #{tpu_custom_call.1} parent=5 // pred_check
        %p461 = pneg %p460
      $region54: #{tpu_custom_call.1} parent=5 // pred_check_branch
        %463 = sbr.rel (%p461) target = $region56
      $region55: #{tpu_custom_call.1} parent=5 // pred_region
        // Predicated region
        $region57: #{tpu_custom_call.1} parent=55 // pred_check
          %p464 = pneg %p65
        $region58: #{tpu_custom_call.1} parent=55 // pred_check_branch
          %466 = sbr.rel (%p464) target = $region60
        $region59: #{tpu_custom_call.1} parent=55 // pred_region
          %s467 = sand.u32 %s55, 1
          %s468 = scalar_lea.sflag [#allocation4], %s467
          %s469 = sand.u32 %s55, 1
          %s470 = smul.addr %s469, 8
          %s471 = scalar_lea.vmem [#allocation3], %s470
          %s473 = ssub.s32 128, 128
          %474 = vsyncadd %s468, %s473
          %s475 = sadd.s32 %s39, %s38
          %s476 = smul.addr %s475, 128
          %s477 = scalar_lea.hbm %s0, %s476
          %s479 = sshll.u32 %s471, 4
          %s480 = int_to_ptr.vmem [resolvable:$true] %s479
          %482 = dma.hbm_to_vmem [thread:$0]  %s477, 128, %s480, %s468
        $region60: #{tpu_custom_call.1} parent=55 // pred_fallthru
          _
        // Predicated region
        $region61: #{tpu_custom_call.1} parent=55 // pred_check
          %p483 = pneg %p91
        $region62: #{tpu_custom_call.1} parent=55 // pred_check_branch
          %485 = sbr.rel (%p483) target = $region64
        $region63: #{tpu_custom_call.1} parent=55 // pred_region
          %s486 = sand.u32 %s31, 1
          %s487 = scalar_lea.sflag [#allocation7], %s486
          %s488 = sand.u32 %s81, 1
          %s489 = smul.addr %s488, 8
          %s490 = scalar_lea.vmem [#allocation6], %s489
          %s492 = ssub.s32 128, 128
          %493 = vsyncadd %s487, %s492
          %s494 = smul.addr %s38, 128
          %s495 = scalar_lea.hbm %s1, %s494
          %s497 = sshll.u32 %s490, 4
          %s498 = int_to_ptr.vmem [resolvable:$true] %s497
          %500 = dma.hbm_to_vmem [thread:$0]  %s495, 128, %s498, %s487
        $region64: #{tpu_custom_call.1} parent=55 // pred_fallthru
          _
        // Predicated region
        $region65: #{tpu_custom_call.1} parent=55 // pred_check
          %p501 = pneg %p117
        $region66: #{tpu_custom_call.1} parent=55 // pred_check_branch
          %503 = sbr.rel (%p501) target = $region68
        $region67: #{tpu_custom_call.1} parent=55 // pred_region
          %s504 = sand.u32 %s31, 1
          %s505 = scalar_lea.sflag [#allocation7], %s504
          %s506 = sand.u32 %s107, 1
          %s507 = scalar_lea.vmem [#allocation8], %s506
          %s509 = ssub.s32 16, 16
          %510 = vsyncadd %s505, %s509
          %s511 = smul.addr %s38, 16
          %s512 = scalar_lea.hbm %s2, %s511
          %s514 = sshll.u32 %s507, 4
          %s515 = int_to_ptr.vmem [resolvable:$true] %s514
          %517 = dma.hbm_to_vmem [thread:$0]  %s512, 16, %s515, %s505
        $region68: #{tpu_custom_call.1} parent=55 // pred_fallthru
          _
      $region56: #{tpu_custom_call.1} parent=5 // pred_fallthru
        _
      %p518 = scmp.le.s32.totalorder 1, %s31
      %p519 = scmp.lt.s32.totalorder %s31, 3
      %p520 = pnand %p518, %p519
      %p521 = pneg %p520
      // Predicated region
      $region69: #{tpu_custom_call.1} parent=5 // pred_check
        _
      $region70: #{tpu_custom_call.1} parent=5 // pred_check_branch
        %523 = sbr.rel (%p520) target = $region72
      $region71: #{tpu_custom_call.1} parent=5 // pred_region
        %s524 = ssub.s32 %s31, 1
        %s525 = sand.u32 %s58, 1
        %s526 = scalar_lea.sflag [#allocation4], %s525
        %s527 = sand.u32 %s58, 1
        %s528 = smul.addr %s527, 8
        %s529 = scalar_lea.vmem [#allocation3], %s528
        // Predicated region
        $region73: #{tpu_custom_call.1} parent=71 // pred_check
          %p530 = pneg %p71
        $region74: #{tpu_custom_call.1} parent=71 // pred_check_branch
          %532 = sbr.rel (%p530) target = $region76
        $region75: #{tpu_custom_call.1} parent=71 // pred_region
          %533 = dma.done %s526, 128
        $region76: #{tpu_custom_call.1} parent=71 // pred_fallthru
          _
        %s534 = sand.u32 %s36, 1
        %s535 = scalar_lea.sflag [#allocation7], %s534
        %s536 = sand.u32 %s84, 1
        %s537 = smul.addr %s536, 8
        %s538 = scalar_lea.vmem [#allocation6], %s537
        // Predicated region
        $region77: #{tpu_custom_call.1} parent=71 // pred_check
          %p539 = pneg %p97
        $region78: #{tpu_custom_call.1} parent=71 // pred_check_branch
          %541 = sbr.rel (%p539) target = $region80
        $region79: #{tpu_custom_call.1} parent=71 // pred_region
          %542 = dma.done %s535, 128
        $region80: #{tpu_custom_call.1} parent=71 // pred_fallthru
          _
        %s543 = sand.u32 %s36, 1
        %s544 = scalar_lea.sflag [#allocation7], %s543
        %s545 = sand.u32 %s110, 1
        %s546 = scalar_lea.vmem [#allocation8], %s545
        // Predicated region
        $region81: #{tpu_custom_call.1} parent=71 // pred_check
          %p547 = pneg %p123
        $region82: #{tpu_custom_call.1} parent=71 // pred_check_branch
          %549 = sbr.rel (%p547) target = $region84
        $region83: #{tpu_custom_call.1} parent=71 // pred_region
          %550 = dma.done %s544, 16
        $region84: #{tpu_custom_call.1} parent=71 // pred_fallthru
          _
        // Predicated region
        $region85: #{tpu_custom_call.1} parent=71 // pred_check
          %p551 = pneg %p144
        $region86: #{tpu_custom_call.1} parent=71 // pred_check_branch
          %553 = sbr.rel (%p551) target = $region88
        $region87: #{tpu_custom_call.1} parent=71 // pred_region
          %554 = dma.done [#allocation10], 256
        $region88: #{tpu_custom_call.1} parent=71 // pred_fallthru
          _
        // Predicated region
        $region89: #{tpu_custom_call.1} parent=71 // pred_check
          %p555 = pneg %p165
        $region90: #{tpu_custom_call.1} parent=71 // pred_check_branch
          %557 = sbr.rel (%p555) target = $region92
        $region91: #{tpu_custom_call.1} parent=71 // pred_region
          %558 = dma.done [#allocation10], 16
        $region92: #{tpu_custom_call.1} parent=71 // pred_fallthru
          _
        // Predicated region
        $region93: #{tpu_custom_call.1} parent=71 // pred_check
          %p559 = pneg %p186
        $region94: #{tpu_custom_call.1} parent=71 // pred_check_branch
          %561 = sbr.rel (%p559) target = $region96
        $region95: #{tpu_custom_call.1} parent=71 // pred_region
          %562 = dma.done [#allocation13], 256
        $region96: #{tpu_custom_call.1} parent=71 // pred_fallthru
          _
        // Predicated region
        $region97: #{tpu_custom_call.1} parent=71 // pred_check
          %p563 = pneg %p207
        $region98: #{tpu_custom_call.1} parent=71 // pred_check_branch
          %565 = sbr.rel (%p563) target = $region100
        $region99: #{tpu_custom_call.1} parent=71 // pred_region
          %566 = dma.done [#allocation13], 16
        $region100: #{tpu_custom_call.1} parent=71 // pred_fallthru
          _
        // Predicated region
        $region101: #{tpu_custom_call.1} parent=71 // pred_check
          %p567 = pneg %p228
        $region102: #{tpu_custom_call.1} parent=71 // pred_check_branch
          %569 = sbr.rel (%p567) target = $region104
        $region103: #{tpu_custom_call.1} parent=71 // pred_region
          %570 = dma.done [#allocation16], 256
        $region104: #{tpu_custom_call.1} parent=71 // pred_fallthru
          _
        // Predicated region
        $region105: #{tpu_custom_call.1} parent=71 // pred_check
          %p571 = pneg %p249
        $region106: #{tpu_custom_call.1} parent=71 // pred_check_branch
          %573 = sbr.rel (%p571) target = $region108
        $region107: #{tpu_custom_call.1} parent=71 // pred_region
          %574 = dma.done [#allocation16], 16
        $region108: #{tpu_custom_call.1} parent=71 // pred_fallthru
          _
        %s575 = sand.u32 %s58, 1
        %s576 = scalar_lea.sflag [#allocation4], %s575
        %s577 = sand.u32 %s58, 1
        %s578 = smul.addr %s577, 8
        %s579 = scalar_lea.vmem [#allocation3], %s578
        %p580 = pneg %p71
        %p581 = pneg %p68
        %s582 = sand.u32 %s36, 1
        %s583 = scalar_lea.sflag [#allocation7], %s582
        %s584 = sand.u32 %s84, 1
        %s585 = smul.addr %s584, 8
        %s586 = scalar_lea.vmem [#allocation6], %s585
        %p587 = pneg %p97
        %p588 = pneg %p94
        %s589 = sand.u32 %s36, 1
        %s590 = scalar_lea.sflag [#allocation7], %s589
        %s591 = sand.u32 %s110, 1
        %s592 = scalar_lea.vmem [#allocation8], %s591
        %p593 = pneg %p123
        %p594 = pneg %p120
        %p595 = pneg %p144
        %p596 = pneg %p141
        %p597 = pneg %p165
        %p598 = pneg %p162
        %p599 = pneg %p186
        %p600 = pneg %p183
        %p601 = pneg %p207
        %p602 = pneg %p204
        %p603 = pneg %p228
        %p604 = pneg %p225
        %p605 = pneg %p249
        %p606 = pneg %p246
        %p607 = pneg %p270
        %p608 = pneg %p267
        %p609 = pneg %p291
        %p610 = pneg %p288
        %p611 = pneg %p312
        %p612 = pneg %p309
        %p613 = pneg %p333
        %p614 = pneg %p330
        %p615 = pneg %p361
        %p616 = pneg %p358
        %s617 = sand.u32 %s348, 1
        %s618 = scalar_lea.sflag [#allocation5], %s617
        %s619 = sand.u32 %s348, 1
        %s620 = smul.addr %s619, 8
        %s621 = scalar_lea.vmem [#allocation18], %s620
        %v623 = vld [vmem:[%s529] sm:$0xff]
        %v624 = vld [vmem:[%s538] sm:$0xff]
        %v625 = vld [vmem:[%s546] sm:$0x1]
        %v626 = vpack.c.bf16 %v623, %v623
        %v627 = vpack.c.bf16 %v624, %v624
        %v628 = vld [vmem:[#allocation9] sm:$0xf]
        %v629 = vld [vmem:[#allocation9 + $0x4] sm:$0xf]
        %v630 = vld [vmem:[#allocation9 + $0x8] sm:$0xf]
        %v631 = vld [vmem:[#allocation9 + $0xc] sm:$0xf]
        %v632 = vld [vmem:[#allocation11] sm:$0x1]
        %v634 = vlaneseq
        %v635 = vshrl.u32 %v634, 7
        %v636 = vsub.s32 0, %v635
        %v637 = vrot.slane %v632, %v636
        %v643 = vunpack.c.l.b16 %v628
        %v644 = vunpack.c.l.b16 %v629
        %v645 = vunpack.c.l.b16 %v630
        %v646 = vunpack.c.l.b16 %v631
        %v647 = vpack.c.b16 %v644, %v643
        %v648 = vpack.c.b16 %v646, %v645
        %vm651 = vcmask 261120
        %v653 = vsel %vm651, %v626, 0
        %655 = vmatprep.subr.bf16.mxu0 0
        %656 = vmatpush1.bf16.msra.mxu0 0
        %657 = vmatprep.subr.bf16.mxu0 0
        %658 = vmatpush1.bf16.msra.mxu0 0
        %659 = vmatprep.subr.bf16.mxu0 0
        %660 = vmatpush1.bf16.msra.mxu0 0
        %661 = vmatprep.subr.bf16.mxu0 0
        %662 = vmatpush1.bf16.msra.mxu0 0
        %663 = vmatprep.subr.bf16.mxu0 0
        %664 = vmatpush1.bf16.msra.mxu0 0
        %665 = vmatprep.subr.bf16.mxu0 0
        %666 = vmatpush1.bf16.msra.mxu0 0
        %667 = vmatprep.subr.bf16.mxu0 0
        %668 = vmatpush1.bf16.msra.mxu0 %v648
        %669 = vmatprep.subr.bf16.mxu0 0
        %670 = vmatpush1.bf16.msra.mxu0 %v647
        %671 = vmatprep.subr.bf16.mxu0 0
        %672 = vmatpush2.bf16.msra.mxu0 0
        %673 = vmatprep.subr.bf16.mxu0 0
        %674 = vmatpush2.bf16.msra.mxu0 0
        %675 = vmatprep.subr.bf16.mxu0 0
        %676 = vmatpush2.bf16.msra.mxu0 0
        %677 = vmatprep.subr.bf16.mxu0 0
        %678 = vmatpush2.bf16.msra.mxu0 0
        %679 = vmatprep.subr.bf16.mxu0 0
        %680 = vmatpush2.bf16.msra.mxu0 0
        %681 = vmatprep.subr.bf16.mxu0 0
        %682 = vmatpush2.bf16.msra.mxu0 0
        %683 = vmatprep.subr.bf16.mxu0 0
        %684 = vmatpush2.bf16.msra.mxu0 0
        %685 = vmatprep.subr.bf16.mxu0 0
        %686 = vmatpush2.bf16.msra.mxu0 0
        %687 = vmatprep.mubr.bf16.mxu0 0
        %688 = vmatmul.mubr.bf16.gmra.mxu0 %v653
        %v689 = vpop.f32.mrf.mxu0
        %v690 = vadd.f32 %v637, %v689
        %v691 = vpop.f32.mrf.mxu0
        %v692 = vpop.f32.mrf.mxu0
        %v693 = vpop.f32.mrf.mxu0
        %694 = vdwg.mxu0
        %v695 = vpack.c.bf16 %v690, %v690
        %v696 = vld [vmem:[#allocation12] sm:$0xf]
        %v697 = vld [vmem:[#allocation12 + $0x4] sm:$0xf]
        %v698 = vld [vmem:[#allocation12 + $0x8] sm:$0xf]
        %v699 = vld [vmem:[#allocation12 + $0xc] sm:$0xf]
        %v700 = vld [vmem:[#allocation14] sm:$0x1]
        %v702 = vlaneseq
        %v703 = vshrl.u32 %v702, 7
        %v704 = vsub.s32 0, %v703
        %v705 = vrot.slane %v700, %v704
        %v711 = vunpack.c.l.b16 %v696
        %v712 = vunpack.c.l.b16 %v697
        %v713 = vunpack.c.l.b16 %v698
        %v714 = vunpack.c.l.b16 %v699
        %v715 = vpack.c.b16 %v712, %v711
        %v716 = vpack.c.b16 %v714, %v713
        %v720 = vsel %vm651, %v627, 0
        %722 = vmatprep.subr.bf16.mxu0 0
        %723 = vmatpush1.bf16.msra.mxu0 0
        %724 = vmatprep.subr.bf16.mxu0 0
        %725 = vmatpush1.bf16.msra.mxu0 0
        %726 = vmatprep.subr.bf16.mxu0 0
        %727 = vmatpush1.bf16.msra.mxu0 0
        %728 = vmatprep.subr.bf16.mxu0 0
        %729 = vmatpush1.bf16.msra.mxu0 0
        %730 = vmatprep.subr.bf16.mxu0 0
        %731 = vmatpush1.bf16.msra.mxu0 0
        %732 = vmatprep.subr.bf16.mxu0 0
        %733 = vmatpush1.bf16.msra.mxu0 0
        %734 = vmatprep.subr.bf16.mxu0 0
        %735 = vmatpush1.bf16.msra.mxu0 %v716
        %736 = vmatprep.subr.bf16.mxu0 0
        %737 = vmatpush1.bf16.msra.mxu0 %v715
        %738 = vmatprep.subr.bf16.mxu0 0
        %739 = vmatpush2.bf16.msra.mxu0 0
        %740 = vmatprep.subr.bf16.mxu0 0
        %741 = vmatpush2.bf16.msra.mxu0 0
        %742 = vmatprep.subr.bf16.mxu0 0
        %743 = vmatpush2.bf16.msra.mxu0 0
        %744 = vmatprep.subr.bf16.mxu0 0
        %745 = vmatpush2.bf16.msra.mxu0 0
        %746 = vmatprep.subr.bf16.mxu0 0
        %747 = vmatpush2.bf16.msra.mxu0 0
        %748 = vmatprep.subr.bf16.mxu0 0
        %749 = vmatpush2.bf16.msra.mxu0 0
        %750 = vmatprep.subr.bf16.mxu0 0
        %751 = vmatpush2.bf16.msra.mxu0 0
        %752 = vmatprep.subr.bf16.mxu0 0
        %753 = vmatpush2.bf16.msra.mxu0 0
        %754 = vmatprep.mubr.bf16.mxu0 0
        %755 = vmatmul.mubr.bf16.gmra.mxu0 %v720
        %v756 = vpop.f32.mrf.mxu0
        %v757 = vadd.f32 %v705, %v756
        %v758 = vpop.f32.mrf.mxu0
        %v759 = vpop.f32.mrf.mxu0
        %v760 = vpop.f32.mrf.mxu0
        %761 = vdwg.mxu0
        %v762 = vpack.c.bf16 %v757, %v757
        %v763 = vld [vmem:[#allocation15] sm:$0xf]
        %v764 = vld [vmem:[#allocation15 + $0x4] sm:$0xf]
        %v765 = vld [vmem:[#allocation15 + $0x8] sm:$0xf]
        %v766 = vld [vmem:[#allocation15 + $0xc] sm:$0xf]
        %v767 = vld [vmem:[#allocation17] sm:$0x1]
        %v769 = vlaneseq
        %v770 = vshrl.u32 %v769, 7
        %v771 = vsub.s32 0, %v770
        %v772 = vrot.slane %v767, %v771
        %v778 = vunpack.c.l.b16 %v763
        %v779 = vunpack.c.l.b16 %v764
        %v780 = vunpack.c.l.b16 %v765
        %v781 = vunpack.c.l.b16 %v766
        %v782 = vpack.c.b16 %v779, %v778
        %v783 = vpack.c.b16 %v781, %v780
        %786 = vmatprep.subr.bf16.mxu0 0
        %787 = vmatpush1.bf16.msra.mxu0 0
        %788 = vmatprep.subr.bf16.mxu0 0
        %789 = vmatpush1.bf16.msra.mxu0 0
        %790 = vmatprep.subr.bf16.mxu0 0
        %791 = vmatpush1.bf16.msra.mxu0 0
        %792 = vmatprep.subr.bf16.mxu0 0
        %793 = vmatpush1.bf16.msra.mxu0 0
        %794 = vmatprep.subr.bf16.mxu0 0
        %795 = vmatpush1.bf16.msra.mxu0 0
        %796 = vmatprep.subr.bf16.mxu0 0
        %797 = vmatpush1.bf16.msra.mxu0 0
        %798 = vmatprep.subr.bf16.mxu0 0
        %799 = vmatpush1.bf16.msra.mxu0 %v783
        %800 = vmatprep.subr.bf16.mxu0 0
        %801 = vmatpush1.bf16.msra.mxu0 %v782
        %802 = vmatprep.subr.bf16.mxu0 0
        %803 = vmatpush2.bf16.msra.mxu0 0
        %804 = vmatprep.subr.bf16.mxu0 0
        %805 = vmatpush2.bf16.msra.mxu0 0
        %806 = vmatprep.subr.bf16.mxu0 0
        %807 = vmatpush2.bf16.msra.mxu0 0
        %808 = vmatprep.subr.bf16.mxu0 0
        %809 = vmatpush2.bf16.msra.mxu0 0
        %810 = vmatprep.subr.bf16.mxu0 0
        %811 = vmatpush2.bf16.msra.mxu0 0
        %812 = vmatprep.subr.bf16.mxu0 0
        %813 = vmatpush2.bf16.msra.mxu0 0
        %814 = vmatprep.subr.bf16.mxu0 0
        %815 = vmatpush2.bf16.msra.mxu0 0
        %816 = vmatprep.subr.bf16.mxu0 0
        %817 = vmatpush2.bf16.msra.mxu0 0
        %818 = vmatprep.mubr.bf16.mxu0 0
        %819 = vmatmul.mubr.bf16.gmra.mxu0 %v720
        %v820 = vpop.f32.mrf.mxu0
        %v821 = vadd.f32 %v772, %v820
        %v822 = vpop.f32.mrf.mxu0
        %v823 = vpop.f32.mrf.mxu0
        %v824 = vpop.f32.mrf.mxu0
        %825 = vdwg.mxu0
        %v826 = vpack.c.bf16 %v821, %v821
        %v828 = vlaneseq
        %v829 = vshrl.u32 %v828, 7
        %v830 = vsub.s32 0, %v829
        %v831 = vrot.slane %v625, %v830
        %vm833 = vcmask 64512
        %v835 = vsel %vm833, %v695, 0
        %v838 = vsel %vm833, %v762, 0
        %840 = vmatprep.subr.bf16.mxu0 0
        %841 = vmatpush1.bf16.xpose.msra.mxu0 0
        %842 = vmatprep.subr.bf16.mxu0 0
        %843 = vmatpush1.bf16.xpose.msra.mxu0 0
        %844 = vmatprep.subr.bf16.mxu0 0
        %845 = vmatpush1.bf16.xpose.msra.mxu0 0
        %846 = vmatprep.subr.bf16.mxu0 0
        %847 = vmatpush1.bf16.xpose.msra.mxu0 0
        %848 = vmatprep.subr.bf16.mxu0 0
        %849 = vmatpush1.bf16.xpose.msra.mxu0 0
        %850 = vmatprep.subr.bf16.mxu0 0
        %851 = vmatpush1.bf16.xpose.msra.mxu0 0
        %852 = vmatprep.subr.bf16.mxu0 0
        %853 = vmatpush1.bf16.xpose.msra.mxu0 0
        %854 = vmatprep.subr.bf16.mxu0 0
        %855 = vmatpush1.bf16.xpose.msra.mxu0 %v838
        %856 = vmatprep.subr.bf16.mxu0 0
        %857 = vmatpush2.bf16.xpose.msra.mxu0 0
        %858 = vmatprep.subr.bf16.mxu0 0
        %859 = vmatpush2.bf16.xpose.msra.mxu0 0
        %860 = vmatprep.subr.bf16.mxu0 0
        %861 = vmatpush2.bf16.xpose.msra.mxu0 0
        %862 = vmatprep.subr.bf16.mxu0 0
        %863 = vmatpush2.bf16.xpose.msra.mxu0 0
        %864 = vmatprep.subr.bf16.mxu0 0
        %865 = vmatpush2.bf16.xpose.msra.mxu0 0
        %866 = vmatprep.subr.bf16.mxu0 0
        %867 = vmatpush2.bf16.xpose.msra.mxu0 0
        %868 = vmatprep.subr.bf16.mxu0 0
        %869 = vmatpush2.bf16.xpose.msra.mxu0 0
        %870 = vmatprep.subr.bf16.mxu0 0
        %871 = vmatpush2.bf16.xpose.msra.mxu0 0
        %872 = vmatprep.mubr.bf16.mxu0 0
        %873 = vmatmul.mubr.bf16.gmra.mxu0 %v835
        %v874 = vpop.f32.mrf.mxu0
        %v875 = vadd.f32 %v831, %v874
        %v876 = vpop.f32.mrf.mxu0
        %v877 = vpop.f32.mrf.mxu0
        %v878 = vpop.f32.mrf.mxu0
        %879 = vdwg.mxu0
        %v880 = vsel %vm833, %v875, -inf
        %881 = vmax.xlane.f32.xlu0 %v880
        %v882 = vpop.xlane.xlu0 %881
        %v883 = vsub.f32 %v875, %v882
        %v884 = vmul.f32 %v883, 1.442695
        %v885 = vpow.pop %v884
        %v886 = vsel %vm833, %v885, 0.0
        %887 = vadd.xlane.f32.xlu0 %v886
        %v888 = vpop.xlane.xlu0 %887
        %v889 = vrcp.pop %v888
        %v890 = vmul.f32 %v885, %v889
        %v891 = vpack.c.bf16 %v890, %v890
        %v893 = vsel %vm833, %v891, 0
        %vm895 = vcmask 1043456
        %v897 = vsel %vm895, %v826, 0
        %899 = vmatprep.subr.bf16.mxu0 0
        %900 = vmatpush1.bf16.msra.mxu0 0
        %901 = vmatprep.subr.bf16.mxu0 0
        %902 = vmatpush1.bf16.msra.mxu0 0
        %903 = vmatprep.subr.bf16.mxu0 0
        %904 = vmatpush1.bf16.msra.mxu0 0
        %905 = vmatprep.subr.bf16.mxu0 0
        %906 = vmatpush1.bf16.msra.mxu0 0
        %907 = vmatprep.subr.bf16.mxu0 0
        %908 = vmatpush1.bf16.msra.mxu0 0
        %909 = vmatprep.subr.bf16.mxu0 0
        %910 = vmatpush1.bf16.msra.mxu0 0
        %911 = vmatprep.subr.bf16.mxu0 0
        %912 = vmatpush1.bf16.msra.mxu0 0
        %913 = vmatprep.subr.bf16.mxu0 0
        %914 = vmatpush1.bf16.msra.mxu0 %v897
        %915 = vmatprep.subr.bf16.mxu0 0
        %916 = vmatpush2.bf16.msra.mxu0 0
        %917 = vmatprep.subr.bf16.mxu0 0
        %918 = vmatpush2.bf16.msra.mxu0 0
        %919 = vmatprep.subr.bf16.mxu0 0
        %920 = vmatpush2.bf16.msra.mxu0 0
        %921 = vmatprep.subr.bf16.mxu0 0
        %922 = vmatpush2.bf16.msra.mxu0 0
        %923 = vmatprep.subr.bf16.mxu0 0
        %924 = vmatpush2.bf16.msra.mxu0 0
        %925 = vmatprep.subr.bf16.mxu0 0
        %926 = vmatpush2.bf16.msra.mxu0 0
        %927 = vmatprep.subr.bf16.mxu0 0
        %928 = vmatpush2.bf16.msra.mxu0 0
        %929 = vmatprep.subr.bf16.mxu0 0
        %930 = vmatpush2.bf16.msra.mxu0 0
        %931 = vmatprep.mubr.bf16.mxu0 0
        %932 = vmatmul.mubr.bf16.gmra.mxu0 %v893
        %v933 = vpop.f32.mrf.mxu0
        %v934 = vadd.f32 0.0, %v933
        %v935 = vpop.f32.mrf.mxu0
        %v936 = vpop.f32.mrf.mxu0
        %v937 = vpop.f32.mrf.mxu0
        %938 = vdwg.mxu0
        %v939 = vpack.c.bf16 %v934, %v934
        %vm940 = vcmask 60416
        %941 = vst.msk [vmem:[#allocation2] sm:$0xf] %vm940, %v939
        %943 = vrot.lane.b32.xlu0 %v695, 120
        %v944 = vpop.permute.xlu0 %943
        %946 = vrot.lane.b32.xlu0 %v762, 120
        %v947 = vpop.permute.xlu0 %946
        %v949 = vsel %vm833, %v944, 0
        %v952 = vsel %vm833, %v947, 0
        %954 = vmatprep.subr.bf16.mxu0 0
        %955 = vmatpush1.bf16.xpose.msra.mxu0 0
        %956 = vmatprep.subr.bf16.mxu0 0
        %957 = vmatpush1.bf16.xpose.msra.mxu0 0
        %958 = vmatprep.subr.bf16.mxu0 0
        %959 = vmatpush1.bf16.xpose.msra.mxu0 0
        %960 = vmatprep.subr.bf16.mxu0 0
        %961 = vmatpush1.bf16.xpose.msra.mxu0 0
        %962 = vmatprep.subr.bf16.mxu0 0
        %963 = vmatpush1.bf16.xpose.msra.mxu0 0
        %964 = vmatprep.subr.bf16.mxu0 0
        %965 = vmatpush1.bf16.xpose.msra.mxu0 0
        %966 = vmatprep.subr.bf16.mxu0 0
        %967 = vmatpush1.bf16.xpose.msra.mxu0 0
        %968 = vmatprep.subr.bf16.mxu0 0
        %969 = vmatpush1.bf16.xpose.msra.mxu0 %v952
        %970 = vmatprep.subr.bf16.mxu0 0
        %971 = vmatpush2.bf16.xpose.msra.mxu0 0
        %972 = vmatprep.subr.bf16.mxu0 0
        %973 = vmatpush2.bf16.xpose.msra.mxu0 0
        %974 = vmatprep.subr.bf16.mxu0 0
        %975 = vmatpush2.bf16.xpose.msra.mxu0 0
        %976 = vmatprep.subr.bf16.mxu0 0
        %977 = vmatpush2.bf16.xpose.msra.mxu0 0
        %978 = vmatprep.subr.bf16.mxu0 0
        %979 = vmatpush2.bf16.xpose.msra.mxu0 0
        %980 = vmatprep.subr.bf16.mxu0 0
        %981 = vmatpush2.bf16.xpose.msra.mxu0 0
        %982 = vmatprep.subr.bf16.mxu0 0
        %983 = vmatpush2.bf16.xpose.msra.mxu0 0
        %984 = vmatprep.subr.bf16.mxu0 0
        %985 = vmatpush2.bf16.xpose.msra.mxu0 0
        %986 = vmatprep.mubr.bf16.mxu0 0
        %987 = vmatmul.mubr.bf16.gmra.mxu0 %v949
        %v988 = vpop.f32.mrf.mxu0
        %v989 = vadd.f32 %v831, %v988
        %v990 = vpop.f32.mrf.mxu0
        %v991 = vpop.f32.mrf.mxu0
        %v992 = vpop.f32.mrf.mxu0
        %993 = vdwg.mxu0
        %v994 = vsel %vm833, %v989, -inf
        %995 = vmax.xlane.f32.xlu0 %v994
        %v996 = vpop.xlane.xlu0 %995
        %v997 = vsub.f32 %v989, %v996
        %v998 = vmul.f32 %v997, 1.442695
        %v999 = vpow.pop %v998
        %v1000 = vsel %vm833, %v999, 0.0
        %1001 = vadd.xlane.f32.xlu0 %v1000
        %v1002 = vpop.xlane.xlu0 %1001
        %v1003 = vrcp.pop %v1002
        %v1004 = vmul.f32 %v999, %v1003
        %v1005 = vpack.c.bf16 %v1004, %v1004
        %1007 = vrot.lane.b32.xlu0 %v826, 120
        %v1008 = vpop.permute.xlu0 %1007
        %v1010 = vsel %vm833, %v1005, 0
        %v1013 = vsel %vm895, %v1008, 0
        %1015 = vmatprep.subr.bf16.mxu0 0
        %1016 = vmatpush1.bf16.msra.mxu0 0
        %1017 = vmatprep.subr.bf16.mxu0 0
        %1018 = vmatpush1.bf16.msra.mxu0 0
        %1019 = vmatprep.subr.bf16.mxu0 0
        %1020 = vmatpush1.bf16.msra.mxu0 0
        %1021 = vmatprep.subr.bf16.mxu0 0
        %1022 = vmatpush1.bf16.msra.mxu0 0
        %1023 = vmatprep.subr.bf16.mxu0 0
        %1024 = vmatpush1.bf16.msra.mxu0 0
        %1025 = vmatprep.subr.bf16.mxu0 0
        %1026 = vmatpush1.bf16.msra.mxu0 0
        %1027 = vmatprep.subr.bf16.mxu0 0
        %1028 = vmatpush1.bf16.msra.mxu0 0
        %1029 = vmatprep.subr.bf16.mxu0 0
        %1030 = vmatpush1.bf16.msra.mxu0 %v1013
        %1031 = vmatprep.subr.bf16.mxu0 0
        %1032 = vmatpush2.bf16.msra.mxu0 0
        %1033 = vmatprep.subr.bf16.mxu0 0
        %1034 = vmatpush2.bf16.msra.mxu0 0
        %1035 = vmatprep.subr.bf16.mxu0 0
        %1036 = vmatpush2.bf16.msra.mxu0 0
        %1037 = vmatprep.subr.bf16.mxu0 0
        %1038 = vmatpush2.bf16.msra.mxu0 0
        %1039 = vmatprep.subr.bf16.mxu0 0
        %1040 = vmatpush2.bf16.msra.mxu0 0
        %1041 = vmatprep.subr.bf16.mxu0 0
        %1042 = vmatpush2.bf16.msra.mxu0 0
        %1043 = vmatprep.subr.bf16.mxu0 0
        %1044 = vmatpush2.bf16.msra.mxu0 0
        %1045 = vmatprep.subr.bf16.mxu0 0
        %1046 = vmatpush2.bf16.msra.mxu0 0
        %1047 = vmatprep.mubr.bf16.mxu0 0
        %1048 = vmatmul.mubr.bf16.gmra.mxu0 %v1010
        %v1049 = vpop.f32.mrf.mxu0
        %v1050 = vadd.f32 0.0, %v1049
        %v1051 = vpop.f32.mrf.mxu0
        %v1052 = vpop.f32.mrf.mxu0
        %v1053 = vpop.f32.mrf.mxu0
        %1054 = vdwg.mxu0
        %v1055 = vpack.c.bf16 %v1050, %v1050
        %v1057 = vunpack.c.l.b16 %v1055
        %v1058 = vpack.c.b16 %v1057, %v1057
        %1059 = vrot.lane.b32.xlu0 %v1058, 8
        %v1060 = vpop.permute.xlu0 %1059
        %vm1062 = vcmask 126016
        %1063 = vst.msk [vmem:[#allocation2] sm:$0xf] %vm1062, %v1060
        %1064 = vrot.lane.b32.xlu0 %v695, 112
        %v1065 = vpop.permute.xlu0 %1064
        %1066 = vrot.lane.b32.xlu0 %v762, 112
        %v1067 = vpop.permute.xlu0 %1066
        %v1069 = vsel %vm833, %v1065, 0
        %v1072 = vsel %vm833, %v1067, 0
        %1074 = vmatprep.subr.bf16.mxu0 0
        %1075 = vmatpush1.bf16.xpose.msra.mxu0 0
        %1076 = vmatprep.subr.bf16.mxu0 0
        %1077 = vmatpush1.bf16.xpose.msra.mxu0 0
        %1078 = vmatprep.subr.bf16.mxu0 0
        %1079 = vmatpush1.bf16.xpose.msra.mxu0 0
        %1080 = vmatprep.subr.bf16.mxu0 0
        %1081 = vmatpush1.bf16.xpose.msra.mxu0 0
        %1082 = vmatprep.subr.bf16.mxu0 0
        %1083 = vmatpush1.bf16.xpose.msra.mxu0 0
        %1084 = vmatprep.subr.bf16.mxu0 0
        %1085 = vmatpush1.bf16.xpose.msra.mxu0 0
        %1086 = vmatprep.subr.bf16.mxu0 0
        %1087 = vmatpush1.bf16.xpose.msra.mxu0 0
        %1088 = vmatprep.subr.bf16.mxu0 0
        %1089 = vmatpush1.bf16.xpose.msra.mxu0 %v1072
        %1090 = vmatprep.subr.bf16.mxu0 0
        %1091 = vmatpush2.bf16.xpose.msra.mxu0 0
        %1092 = vmatprep.subr.bf16.mxu0 0
        %1093 = vmatpush2.bf16.xpose.msra.mxu0 0
        %1094 = vmatprep.subr.bf16.mxu0 0
        %1095 = vmatpush2.bf16.xpose.msra.mxu0 0
        %1096 = vmatprep.subr.bf16.mxu0 0
        %1097 = vmatpush2.bf16.xpose.msra.mxu0 0
        %1098 = vmatprep.subr.bf16.mxu0 0
        %1099 = vmatpush2.bf16.xpose.msra.mxu0 0
        %1100 = vmatprep.subr.bf16.mxu0 0
        %1101 = vmatpush2.bf16.xpose.msra.mxu0 0
        %1102 = vmatprep.subr.bf16.mxu0 0
        %1103 = vmatpush2.bf16.xpose.msra.mxu0 0
        %1104 = vmatprep.subr.bf16.mxu0 0
        %1105 = vmatpush2.bf16.xpose.msra.mxu0 0
        %1106 = vmatprep.mubr.bf16.mxu0 0
        %1107 = vmatmul.mubr.bf16.gmra.mxu0 %v1069
        %v1108 = vpop.f32.mrf.mxu0
        %v1109 = vadd.f32 %v831, %v1108
        %v1110 = vpop.f32.mrf.mxu0
        %v1111 = vpop.f32.mrf.mxu0
        %v1112 = vpop.f32.mrf.mxu0
        %1113 = vdwg.mxu0
        %v1114 = vsel %vm833, %v1109, -inf
        %1115 = vmax.xlane.f32.xlu0 %v1114
        %v1116 = vpop.xlane.xlu0 %1115
        %v1117 = vsub.f32 %v1109, %v1116
        %v1118 = vmul.f32 %v1117, 1.442695
        %v1119 = vpow.pop %v1118
        %v1120 = vsel %vm833, %v1119, 0.0
        %1121 = vadd.xlane.f32.xlu0 %v1120
        %v1122 = vpop.xlane.xlu0 %1121
        %v1123 = vrcp.pop %v1122
        %v1124 = vmul.f32 %v1119, %v1123
        %v1125 = vpack.c.bf16 %v1124, %v1124
        %1126 = vrot.lane.b32.xlu0 %v826, 112
        %v1127 = vpop.permute.xlu0 %1126
        %v1129 = vsel %vm833, %v1125, 0
        %v1132 = vsel %vm895, %v1127, 0
        %1134 = vmatprep.subr.bf16.mxu0 0
        %1135 = vmatpush1.bf16.msra.mxu0 0
        %1136 = vmatprep.subr.bf16.mxu0 0
        %1137 = vmatpush1.bf16.msra.mxu0 0
        %1138 = vmatprep.subr.bf16.mxu0 0
        %1139 = vmatpush1.bf16.msra.mxu0 0
        %1140 = vmatprep.subr.bf16.mxu0 0
        %1141 = vmatpush1.bf16.msra.mxu0 0
        %1142 = vmatprep.subr.bf16.mxu0 0
        %1143 = vmatpush1.bf16.msra.mxu0 0
        %1144 = vmatprep.subr.bf16.mxu0 0
        %1145 = vmatpush1.bf16.msra.mxu0 0
        %1146 = vmatprep.subr.bf16.mxu0 0
        %1147 = vmatpush1.bf16.msra.mxu0 0
        %1148 = vmatprep.subr.bf16.mxu0 0
        %1149 = vmatpush1.bf16.msra.mxu0 %v1132
        %1150 = vmatprep.subr.bf16.mxu0 0
        %1151 = vmatpush2.bf16.msra.mxu0 0
        %1152 = vmatprep.subr.bf16.mxu0 0
        %1153 = vmatpush2.bf16.msra.mxu0 0
        %1154 = vmatprep.subr.bf16.mxu0 0
        %1155 = vmatpush2.bf16.msra.mxu0 0
        %1156 = vmatprep.subr.bf16.mxu0 0
        %1157 = vmatpush2.bf16.msra.mxu0 0
        %1158 = vmatprep.subr.bf16.mxu0 0
        %1159 = vmatpush2.bf16.msra.mxu0 0
        %1160 = vmatprep.subr.bf16.mxu0 0
        %1161 = vmatpush2.bf16.msra.mxu0 0
        %1162 = vmatprep.subr.bf16.mxu0 0
        %1163 = vmatpush2.bf16.msra.mxu0 0
        %1164 = vmatprep.subr.bf16.mxu0 0
        %1165 = vmatpush2.bf16.msra.mxu0 0
        %1166 = vmatprep.mubr.bf16.mxu0 0
        %1167 = vmatmul.mubr.bf16.gmra.mxu0 %v1129
        %v1168 = vpop.f32.mrf.mxu0
        %v1169 = vadd.f32 0.0, %v1168
        %v1170 = vpop.f32.mrf.mxu0
        %v1171 = vpop.f32.mrf.mxu0
        %v1172 = vpop.f32.mrf.mxu0
        %1173 = vdwg.mxu0
        %v1174 = vpack.c.bf16 %v1169, %v1169
        %v1176 = vunpack.c.l.b16 %v1174
        %v1177 = vpack.c.b16 %v1176, %v1176
        %1178 = vrot.lane.b32.xlu0 %v1177, 16
        %v1179 = vpop.permute.xlu0 %1178
        %vm1181 = vcmask 191616
        %1182 = vst.msk [vmem:[#allocation2] sm:$0xf] %vm1181, %v1179
        %1183 = vrot.lane.b32.xlu0 %v695, 104
        %v1184 = vpop.permute.xlu0 %1183
        %1185 = vrot.lane.b32.xlu0 %v762, 104
        %v1186 = vpop.permute.xlu0 %1185
        %v1188 = vsel %vm833, %v1184, 0
        %v1191 = vsel %vm833, %v1186, 0
        %1193 = vmatprep.subr.bf16.mxu0 0
        %1194 = vmatpush1.bf16.xpose.msra.mxu0 0
        %1195 = vmatprep.subr.bf16.mxu0 0
        %1196 = vmatpush1.bf16.xpose.msra.mxu0 0
        %1197 = vmatprep.subr.bf16.mxu0 0
        %1198 = vmatpush1.bf16.xpose.msra.mxu0 0
        %1199 = vmatprep.subr.bf16.mxu0 0
        %1200 = vmatpush1.bf16.xpose.msra.mxu0 0
        %1201 = vmatprep.subr.bf16.mxu0 0
        %1202 = vmatpush1.bf16.xpose.msra.mxu0 0
        %1203 = vmatprep.subr.bf16.mxu0 0
        %1204 = vmatpush1.bf16.xpose.msra.mxu0 0
        %1205 = vmatprep.subr.bf16.mxu0 0
        %1206 = vmatpush1.bf16.xpose.msra.mxu0 0
        %1207 = vmatprep.subr.bf16.mxu0 0
        %1208 = vmatpush1.bf16.xpose.msra.mxu0 %v1191
        %1209 = vmatprep.subr.bf16.mxu0 0
        %1210 = vmatpush2.bf16.xpose.msra.mxu0 0
        %1211 = vmatprep.subr.bf16.mxu0 0
        %1212 = vmatpush2.bf16.xpose.msra.mxu0 0
        %1213 = vmatprep.subr.bf16.mxu0 0
        %1214 = vmatpush2.bf16.xpose.msra.mxu0 0
        %1215 = vmatprep.subr.bf16.mxu0 0
        %1216 = vmatpush2.bf16.xpose.msra.mxu0 0
        %1217 = vmatprep.subr.bf16.mxu0 0
        %1218 = vmatpush2.bf16.xpose.msra.mxu0 0
        %1219 = vmatprep.subr.bf16.mxu0 0
        %1220 = vmatpush2.bf16.xpose.msra.mxu0 0
        %1221 = vmatprep.subr.bf16.mxu0 0
        %1222 = vmatpush2.bf16.xpose.msra.mxu0 0
        %1223 = vmatprep.subr.bf16.mxu0 0
        %1224 = vmatpush2.bf16.xpose.msra.mxu0 0
        %1225 = vmatprep.mubr.bf16.mxu0 0
        %1226 = vmatmul.mubr.bf16.gmra.mxu0 %v1188
        %v1227 = vpop.f32.mrf.mxu0
        %v1228 = vadd.f32 %v831, %v1227
        %v1229 = vpop.f32.mrf.mxu0
        %v1230 = vpop.f32.mrf.mxu0
        %v1231 = vpop.f32.mrf.mxu0
        %1232 = vdwg.mxu0
        %v1233 = vsel %vm833, %v1228, -inf
        %1234 = vmax.xlane.f32.xlu0 %v1233
        %v1235 = vpop.xlane.xlu0 %1234
        %v1236 = vsub.f32 %v1228, %v1235
        %v1237 = vmul.f32 %v1236, 1.442695
        %v1238 = vpow.pop %v1237
        %v1239 = vsel %vm833, %v1238, 0.0
        %1240 = vadd.xlane.f32.xlu0 %v1239
        %v1241 = vpop.xlane.xlu0 %1240
        %v1242 = vrcp.pop %v1241
        %v1243 = vmul.f32 %v1238, %v1242
        %v1244 = vpack.c.bf16 %v1243, %v1243
        %1245 = vrot.lane.b32.xlu0 %v826, 104
        %v1246 = vpop.permute.xlu0 %1245
        %v1248 = vsel %vm833, %v1244, 0
        %v1251 = vsel %vm895, %v1246, 0
        %1253 = vmatprep.subr.bf16.mxu0 0
        %1254 = vmatpush1.bf16.msra.mxu0 0
        %1255 = vmatprep.subr.bf16.mxu0 0
        %1256 = vmatpush1.bf16.msra.mxu0 0
        %1257 = vmatprep.subr.bf16.mxu0 0
        %1258 = vmatpush1.bf16.msra.mxu0 0
        %1259 = vmatprep.subr.bf16.mxu0 0
        %1260 = vmatpush1.bf16.msra.mxu0 0
        %1261 = vmatprep.subr.bf16.mxu0 0
        %1262 = vmatpush1.bf16.msra.mxu0 0
        %1263 = vmatprep.subr.bf16.mxu0 0
        %1264 = vmatpush1.bf16.msra.mxu0 0
        %1265 = vmatprep.subr.bf16.mxu0 0
        %1266 = vmatpush1.bf16.msra.mxu0 0
        %1267 = vmatprep.subr.bf16.mxu0 0
        %1268 = vmatpush1.bf16.msra.mxu0 %v1251
        %1269 = vmatprep.subr.bf16.mxu0 0
        %1270 = vmatpush2.bf16.msra.mxu0 0
        %1271 = vmatprep.subr.bf16.mxu0 0
        %1272 = vmatpush2.bf16.msra.mxu0 0
        %1273 = vmatprep.subr.bf16.mxu0 0
        %1274 = vmatpush2.bf16.msra.mxu0 0
        %1275 = vmatprep.subr.bf16.mxu0 0
        %1276 = vmatpush2.bf16.msra.mxu0 0
        %1277 = vmatprep.subr.bf16.mxu0 0
        %1278 = vmatpush2.bf16.msra.mxu0 0
        %1279 = vmatprep.subr.bf16.mxu0 0
        %1280 = vmatpush2.bf16.msra.mxu0 0
        %1281 = vmatprep.subr.bf16.mxu0 0
        %1282 = vmatpush2.bf16.msra.mxu0 0
        %1283 = vmatprep.subr.bf16.mxu0 0
        %1284 = vmatpush2.bf16.msra.mxu0 0
        %1285 = vmatprep.mubr.bf16.mxu0 0
        %1286 = vmatmul.mubr.bf16.gmra.mxu0 %v1248
        %v1287 = vpop.f32.mrf.mxu0
        %v1288 = vadd.f32 0.0, %v1287
        %v1289 = vpop.f32.mrf.mxu0
        %v1290 = vpop.f32.mrf.mxu0
        %v1291 = vpop.f32.mrf.mxu0
        %1292 = vdwg.mxu0
        %v1293 = vpack.c.bf16 %v1288, %v1288
        %v1295 = vunpack.c.l.b16 %v1293
        %v1296 = vpack.c.b16 %v1295, %v1295
        %1297 = vrot.lane.b32.xlu0 %v1296, 24
        %v1298 = vpop.permute.xlu0 %1297
        %vm1300 = vcmask 257216
        %1301 = vst.msk [vmem:[#allocation2] sm:$0xf] %vm1300, %v1298
        %v1302 = vld [vmem:[#allocation2] sm:$0xf]
        %v1303 = vld [vmem:[%s9] sm:$0xf]
        %v1304 = vld [vmem:[%s9 + $0x4] sm:$0xf]
        %v1305 = vld [vmem:[%s9 + $0x8] sm:$0xf]
        %v1306 = vld [vmem:[%s9 + $0xc] sm:$0xf]
        %v1307 = vld [vmem:[%s10] sm:$0x1]
        %v1309 = vlaneseq
        %v1310 = vshrl.u32 %v1309, 7
        %v1311 = vsub.s32 0, %v1310
        %v1312 = vrot.slane %v1307, %v1311
        %v1318 = vunpack.c.l.b16 %v1303
        %v1319 = vunpack.c.l.b16 %v1304
        %v1320 = vunpack.c.l.b16 %v1305
        %v1321 = vunpack.c.l.b16 %v1306
        %v1322 = vpack.c.b16 %v1319, %v1318
        %v1323 = vpack.c.b16 %v1321, %v1320
        %v1327 = vsel %vm651, %v1302, 0
        %1329 = vmatprep.subr.bf16.mxu0 0
        %1330 = vmatpush1.bf16.msra.mxu0 0
        %1331 = vmatprep.subr.bf16.mxu0 0
        %1332 = vmatpush1.bf16.msra.mxu0 0
        %1333 = vmatprep.subr.bf16.mxu0 0
        %1334 = vmatpush1.bf16.msra.mxu0 0
        %1335 = vmatprep.subr.bf16.mxu0 0
        %1336 = vmatpush1.bf16.msra.mxu0 0
        %1337 = vmatprep.subr.bf16.mxu0 0
        %1338 = vmatpush1.bf16.msra.mxu0 0
        %1339 = vmatprep.subr.bf16.mxu0 0
        %1340 = vmatpush1.bf16.msra.mxu0 0
        %1341 = vmatprep.subr.bf16.mxu0 0
        %1342 = vmatpush1.bf16.msra.mxu0 %v1323
        %1343 = vmatprep.subr.bf16.mxu0 0
        %1344 = vmatpush1.bf16.msra.mxu0 %v1322
        %1345 = vmatprep.subr.bf16.mxu0 0
        %1346 = vmatpush2.bf16.msra.mxu0 0
        %1347 = vmatprep.subr.bf16.mxu0 0
        %1348 = vmatpush2.bf16.msra.mxu0 0
        %1349 = vmatprep.subr.bf16.mxu0 0
        %1350 = vmatpush2.bf16.msra.mxu0 0
        %1351 = vmatprep.subr.bf16.mxu0 0
        %1352 = vmatpush2.bf16.msra.mxu0 0
        %1353 = vmatprep.subr.bf16.mxu0 0
        %1354 = vmatpush2.bf16.msra.mxu0 0
        %1355 = vmatprep.subr.bf16.mxu0 0
        %1356 = vmatpush2.bf16.msra.mxu0 0
        %1357 = vmatprep.subr.bf16.mxu0 0
        %1358 = vmatpush2.bf16.msra.mxu0 0
        %1359 = vmatprep.subr.bf16.mxu0 0
        %1360 = vmatpush2.bf16.msra.mxu0 0
        %1361 = vmatprep.mubr.bf16.mxu0 0
        %1362 = vmatmul.mubr.bf16.gmra.mxu0 %v1327
        %v1363 = vpop.f32.mrf.mxu0
        %v1364 = vadd.f32 %v1312, %v1363
        %v1365 = vpop.f32.mrf.mxu0
        %v1366 = vpop.f32.mrf.mxu0
        %v1367 = vpop.f32.mrf.mxu0
        %1368 = vdwg.mxu0
        %v1369 = vadd.f32 %v1364, %v623
        %v1370 = vld [vmem:[%s11] sm:$0x1]
        %v1371 = vld [vmem:[%s12] sm:$0x1]
        %v1372 = vsel %vm651, %v1369, 0.0
        %1373 = vadd.xlane.f32.xlu0 %v1372
        %v1374 = vpop.xlane.xlu0 %1373
        %v1375 = vrcp.pop 32.0
        %v1376 = vmul.f32 %v1374, %v1375
        %v1377 = vsub.f32 %v1369, %v1376
        %v1378 = vmul.f32 %v1377, %v1377
        %v1379 = vsel %vm651, %v1378, 0.0
        %1380 = vadd.xlane.f32.xlu0 %v1379
        %v1381 = vpop.xlane.xlu0 %1380
        %v1382 = vmul.f32 %v1381, %v1375
        %v1383 = vadd.f32 %v1382, 1e-12
        %v1384 = vrsqrt.pop %v1383
        %v1385 = vmul.f32 %v1377, %v1384
        %v1387 = vlaneseq
        %v1388 = vshrl.u32 %v1387, 7
        %v1389 = vsub.s32 0, %v1388
        %v1390 = vrot.slane %v1370, %v1389
        %v1392 = vmul.f32 %v1385, %v1390
        %v1394 = vlaneseq
        %v1395 = vshrl.u32 %v1394, 7
        %v1396 = vsub.s32 0, %v1395
        %v1397 = vrot.slane %v1371, %v1396
        %v1399 = vadd.f32 %v1392, %v1397
        %1400 = vst.msk [vmem:[%s621] sm:$0xff] %vm651, %v1399
        %s1401 = sand.u32 %s348, 1
        %s1402 = scalar_lea.sflag [#allocation5], %s1401
        %s1403 = sand.u32 %s348, 1
        %s1404 = smul.addr %s1403, 8
        %s1405 = scalar_lea.vmem [#allocation18], %s1404
        // Predicated region
        $region109: #{tpu_custom_call.1} parent=71 // pred_check
          %p1406 = pneg %p358
        $region110: #{tpu_custom_call.1} parent=71 // pred_check_branch
          %1408 = sbr.rel (%p1406) target = $region112
        $region111: #{tpu_custom_call.1} parent=71 // pred_region
          %s1410 = ssub.s32 128, 128
          %1411 = vsyncadd %s1402, %s1410
          %s1412 = sadd.s32 %s41, %s40
          %s1413 = smul.addr %s1412, 128
          %s1414 = scalar_lea.hbm %s13, %s1413
          %s1416 = sshll.u32 %s1405, 4
          %s1417 = int_to_ptr.vmem [resolvable:$true] %s1416
          %1419 = dma.vmem_to_hbm [thread:$0]  %s1417, 128, %s1414, %s1402
        $region112: #{tpu_custom_call.1} parent=71 // pred_fallthru
          _
      $region72: #{tpu_custom_call.1} parent=5 // pred_fallthru
        _
      %p1420 = scmp.le.s32.totalorder 2, %s31
      // Predicated region
      $region113: #{tpu_custom_call.1} parent=5 // pred_check
        %p1421 = pneg %p1420
      $region114: #{tpu_custom_call.1} parent=5 // pred_check_branch
        %1423 = sbr.rel (%p1421) target = $region116
      $region115: #{tpu_custom_call.1} parent=5 // pred_region
        %s1424 = ssub.s32 %s31, 2
        // Predicated region
        $region117: #{tpu_custom_call.1} parent=115 // pred_check
          %p1425 = pneg %p364
        $region118: #{tpu_custom_call.1} parent=115 // pred_check_branch
          %1427 = sbr.rel (%p1425) target = $region120
        $region119: #{tpu_custom_call.1} parent=115 // pred_region
          %s1428 = sand.u32 %s349, 1
          %s1429 = scalar_lea.sflag [#allocation5], %s1428
          %s1430 = sand.u32 %s349, 1
          %s1431 = smul.addr %s1430, 8
          %s1432 = scalar_lea.vmem [#allocation18], %s1431
          %1433 = dma.done %s1429, 128
        $region120: #{tpu_custom_call.1} parent=115 // pred_fallthru
          _
      $region116: #{tpu_custom_call.1} parent=5 // pred_fallthru
        _
    $region6: #{tpu_custom_call.1} parent=1 // loop_footer
      %s35 = sadd.s32 1, %s31
    $region7: #{tpu_custom_call.1} parent=1 // loop_footer_branch
      %30 = sbr.rel target = $region3
    $region8: #{tpu_custom_call.1} parent=1 // loop_exit
      _
    %1434 = vsyncpa [#allocation4], 1
    %s1435 = scalar_lea.sflag [#allocation4], 1
    %1436 = vsyncpa %s1435, 1
    %1437 = vsyncpa [#allocation7], 1
    %s1438 = scalar_lea.sflag [#allocation7], 1
    %1439 = vsyncpa %s1438, 1
    %1440 = vsyncpa [#allocation10], 1
    %1441 = vsyncpa [#allocation13], 1
    %1442 = vsyncpa [#allocation16], 1
    %1443 = vsyncpa [#allocation5], 1
    %s1444 = scalar_lea.sflag [#allocation5], 1
    %1445 = vsyncpa %s1444, 1

</llo_original>
